<compile_context>
chip_gen: v7x
topology: tpu7x:2x2x1
jax: 0.10.0
libtpu: 0.0.40
codegen_flags: <defaults>
</compile_context>

<pallas_src>
import jax
import jax.numpy as jnp
from jax import lax
from jax.experimental import pallas as pl
from jax.experimental.pallas import tpu as pltpu

EPS = 1e-5
NEG_INF = -1e30


def _layernorm(h, g, b):
    # One-pass statistics (sum + sum-of-squares): a single pair of lane reductions.
    # Cancellation risk is negligible here (f32 activations, eps=1e-5 floor).
    n = h.shape[-1]
    s = jnp.sum(h, axis=-1, keepdims=True)
    ss = jnp.sum(h * h, axis=-1, keepdims=True)
    mean = s * (1.0 / n)
    var = ss * (1.0 / n) - mean * mean
    return (h - mean) * lax.rsqrt(var + EPS) * g + b


def decoder_block_kernel(x_ref, wqkv_ref, wo_ref, ln_ref, wgu_ref, wd_ref, o_ref):
    B, T, D = x_ref.shape
    H, _, k3 = wqkv_ref.shape
    hd = k3 // 3
    Hm = wd_ref.shape[0]
    G = B * H

    x3 = x_ref[...]                          # (B, T, D) f32
    x2 = x3.reshape(B * T, D)                # leading-dim merge (tile-aligned, free)

    ln = ln_ref[...]                         # (4, D): [gamma1; beta1; gamma2; beta2]
    g1, b1 = ln[0:1, :], ln[1:2, :]
    g2, b2 = ln[2:3, :], ln[3:4, :]

    # ---- res = norm1(x) -------------------------------------------------------
    res1 = _layernorm(x2, g1, b1)

    # ---- x = self_attention(x): causal MHA ------------------------------------
    # Fold batch and head into one leading axis G = B*H so every contraction is a
    # leading-batch, single-contracting-dim einsum (the Mosaic-proven flash pattern)
    # and scores are G independent (T, T) tiles — no cross-batch score FLOPs.
    xg = jnp.broadcast_to(x3[:, None, :, :], (B, H, T, D)).reshape(G, T, D)
    wqkv_g = jnp.broadcast_to(wqkv_ref[...][None], (B, H, D, 3 * hd)).reshape(G, D, 3 * hd)

    # Fused Q/K/V projection: one matmul per (batch, head) instead of three.
    qkv = jnp.einsum("gtd,gdk->gtk", xg, wqkv_g,
                     preferred_element_type=jnp.float32)         # (G, T, 3*hd)
    q = qkv[:, :, :hd]                       # 1/sqrt(hd) already folded into wq
    k = qkv[:, :, hd:2 * hd]
    v = qkv[:, :, 2 * hd:]

    s = jnp.einsum("gqd,gkd->gqk", q, k,
                   preferred_element_type=jnp.float32)           # (G, T, T)

    # In-kernel causal mask (VPU work hidden under MXU/EUP slack; no HBM bias DMA).
    row = lax.broadcasted_iota(jnp.int32, (G, T, T), 1)
    col = lax.broadcasted_iota(jnp.int32, (G, T, T), 2)
    s = jnp.where(col <= row, s, NEG_INF)

    m = jnp.max(s, axis=-1, keepdims=True)
    e = jnp.exp(s - m)
    denom = jnp.sum(e, axis=-1, keepdims=True)
    r = pl.reciprocal(denom, approx=True)                        # EUP slot
    r = r * (2.0 - denom * r)                                    # one NR step -> ~exact
    p = e * r

    ctx = jnp.einsum("gqk,gkd->gqd", p, v,
                     preferred_element_type=jnp.float32)         # (G, T, hd)

    # Per-head output projection, then head reduction:
    #   concat_h(ctx_h) @ Wo == sum_h ctx_h @ Wo_h   (no lane concat / relayout).
    wo_g = jnp.broadcast_to(wo_ref[...][None], (B, H, hd, D)).reshape(G, hd, D)
    proj = jnp.einsum("gqd,gdm->gqm", ctx, wo_g,
                      preferred_element_type=jnp.float32)        # (G, T, D)
    attn_out = jnp.sum(proj.reshape(B, H, T, D), axis=1).reshape(B * T, D)

    # ---- x = norm1(attn_out); x = x + res --------------------------------------
    x1 = _layernorm(attn_out, g1, b1) + res1

    # ---- res = norm2(x) ---------------------------------------------------------
    res2 = _layernorm(x1, g2, b2)

    # ---- x = mlp(x): down( silu(gate(x)) * up(x) ), gate/up fused ---------------
    gu = jnp.dot(x1, wgu_ref[...], preferred_element_type=jnp.float32)   # (BT, 2*Hm)
    gate = gu[:, :Hm]
    up = gu[:, Hm:]
    act = gate * jax.nn.sigmoid(gate) * up                       # SiLU(gate) * up
    mlp_out = jnp.dot(act, wd_ref[...], preferred_element_type=jnp.float32)

    # ---- x = norm2(mlp_out); x = x + res ----------------------------------------
    o_ref[...] = (_layernorm(mlp_out, g2, b2) + res2).reshape(B, T, D)


def usta_decoder_block(x, params, *, num_heads):
    B, T, D = x.shape
    assert D % num_heads == 0
    hd = D // num_heads
    Hm = params["wg"].shape[1]

    # ---- one-time wrapper-side (plain XLA) parameter packing --------------------
    scale = 1.0 / (hd ** 0.5)
    wq_h = (params["wq"] * scale).reshape(D, num_heads, hd).transpose(1, 0, 2)  # (H, D, hd)
    wk_h = params["wk"].reshape(D, num_heads, hd).transpose(1, 0, 2)
    wv_h = params["wv"].reshape(D, num_heads, hd).transpose(1, 0, 2)
    wqkv = jnp.concatenate([wq_h, wk_h, wv_h], axis=-1)                         # (H, D, 3*hd)
    wo_h = params["wo"].reshape(num_heads, hd, D)                               # (H, hd, D)
    ln = jnp.concatenate(
        [params["g1"], params["b1"], params["g2"], params["b2"]], axis=0)       # (4, D)
    wgu = jnp.concatenate([params["wg"], params["wu"]], axis=1)                 # (D, 2*Hm)

    vmem = pl.BlockSpec(memory_space=pltpu.MemorySpace.VMEM)
    out = pl.pallas_call(
        decoder_block_kernel,
        out_shape=jax.ShapeDtypeStruct((B, T, D), jnp.float32),
        in_specs=[vmem] * 6,
        out_specs=vmem,
        # No grid: single invocation. At production sizes add a "parallel" grid axis
        # over batch / q-tiles (v7x has 2 TensorCores) and bf16 dot inputs.
    )(x.astype(jnp.float32), wqkv, wo_h, ln, wgu, params["wd"])
    return out


def reference(x, p, *, num_heads):
    """Pure-JAX reference implementing the same forward pass."""
    def ln(h, g, b):
        mean = jnp.mean(h, axis=-1, keepdims=True)
        var = jnp.mean((h - mean) ** 2, axis=-1, keepdims=True)
        return (h - mean) / jnp.sqrt(var + EPS) * g[0] + b[0]

    B, T, D = x.shape
    hd = D // num_heads
    res1 = ln(x, p["g1"], p["b1"])

    q = x @ p["wq"]
    k = x @ p["wk"]
    v = x @ p["wv"]
    q = q.reshape(B, T, num_heads, hd).transpose(0, 2, 1, 3)
    k = k.reshape(B, T, num_heads, hd).transpose(0, 2, 1, 3)
    v = v.reshape(B, T, num_heads, hd).transpose(0, 2, 1, 3)
    scores = jnp.einsum("bhqd,bhkd->bhqk", q, k) / (hd ** 0.5)
    mask = jnp.tril(jnp.ones((T, T), bool))
    scores = jnp.where(mask, scores, -jnp.inf)
    attn = jax.nn.softmax(scores, axis=-1)
    ctx = jnp.einsum("bhqk,bhkd->bhqd", attn, v).transpose(0, 2, 1, 3).reshape(B, T, D)
    attn_out = ctx @ p["wo"]

    x1 = ln(attn_out, p["g1"], p["b1"]) + res1
    res2 = ln(x1, p["g2"], p["b2"])
    mlp_out = (jax.nn.silu(x1 @ p["wg"]) * (x1 @ p["wu"])) @ p["wd"]
    return ln(mlp_out, p["g2"], p["b2"]) + res2


if __name__ == "__main__":
    B, T, D, NUM_HEADS = 2, 8, 32, 4   # context_length = T = 8, embedding_dim = 32
    key = jax.random.PRNGKey(0)
    keys = jax.random.split(key, 9)

    def w(k, shape):
        return jax.random.normal(k, shape, jnp.float32) * 0.02

    params = {
        # attention projections (stored pre-transposed so the math is x @ W)
        "wq": w(keys[0], (D, D)),
        "wk": w(keys[1], (D, D)),
        "wv": w(keys[2], (D, D)),
        "wo": w(keys[3], (D, D)),
        # layer norms
        "g1": jnp.ones((1, D), jnp.float32),
        "b1": jnp.zeros((1, D), jnp.float32),
        "g2": jnp.ones((1, D), jnp.float32),
        "b2": jnp.zeros((1, D), jnp.float32),
        # gated MLP (hidden = embedding_dim per UstaMLP(embedding_dim, embedding_dim))
        "wg": w(keys[4], (D, D)),
        "wu": w(keys[5], (D, D)),
        "wd": w(keys[6], (D, D)),
    }

    x = jax.random.normal(keys[7], (B, T, D), jnp.float32)

    out = usta_decoder_block(x, params, num_heads=NUM_HEADS)
    out = jax.block_until_ready(out)

    ref = reference(x, params, num_heads=NUM_HEADS)
    assert out.shape == (B, T, D)
    # Newton-refined reciprocal makes the softmax ~f32-exact, so a tight tolerance
    # is meaningful (any structural bug produces O(0.1..1) errors here).
    assert jnp.allclose(out, ref, atol=1e-3, rtol=1e-3), "mismatch vs pure-JAX reference"

    print("KERNEL_OK")
</pallas_src>

<mosaic_0001>
module attributes {stable_mosaic.version = 11 : i64} {
  func.func @decoder_block_kernel(%arg0: memref<2x8x32xf32, #tpu.memory_space<vmem>>, %arg1: memref<4x32x24xf32, #tpu.memory_space<vmem>>, %arg2: memref<4x8x32xf32, #tpu.memory_space<vmem>>, %arg3: memref<4x32xf32, #tpu.memory_space<vmem>>, %arg4: memref<32x64xf32, #tpu.memory_space<vmem>>, %arg5: memref<32x32xf32, #tpu.memory_space<vmem>>, %arg6: memref<2x8x32xf32, #tpu.memory_space<vmem>>) attributes {dimension_semantics = [], scalar_prefetch = 0 : i64, scratch_operands = 0 : i64, tpu.core_type = #tpu.core_type<tc>} {
    %c0 = arith.constant 0 : index
    %c0_0 = arith.constant 0 : index
    %c0_1 = arith.constant 0 : index
    %0 = vector.load %arg0[%c0, %c0_0, %c0_1] : memref<2x8x32xf32, #tpu.memory_space<vmem>>, vector<2x8x32xf32>
    %1 = vector.shape_cast %0 : vector<2x8x32xf32> to vector<16x32xf32>
    %c0_2 = arith.constant 0 : index
    %c0_3 = arith.constant 0 : index
    %2 = vector.load %arg3[%c0_2, %c0_3] : memref<4x32xf32, #tpu.memory_space<vmem>>, vector<4x32xf32>
    %3 = vector.extract_strided_slice %2 {offsets = [0, 0], sizes = [1, 32], strides = [1, 1]} : vector<4x32xf32> to vector<1x32xf32>
    %4 = vector.extract_strided_slice %2 {offsets = [1, 0], sizes = [1, 32], strides = [1, 1]} : vector<4x32xf32> to vector<1x32xf32>
    %5 = vector.extract_strided_slice %2 {offsets = [2, 0], sizes = [1, 32], strides = [1, 1]} : vector<4x32xf32> to vector<1x32xf32>
    %6 = vector.extract_strided_slice %2 {offsets = [3, 0], sizes = [1, 32], strides = [1, 1]} : vector<4x32xf32> to vector<1x32xf32>
    %cst = arith.constant dense<0.000000e+00> : vector<16xf32>
    %7 = vector.multi_reduction <add>, %1, %cst [1] : vector<16x32xf32> to vector<16xf32>
    %8 = vector.shape_cast %7 : vector<16xf32> to vector<16x1xf32>
    %9 = arith.mulf %1, %1 : vector<16x32xf32>
    %cst_4 = arith.constant dense<0.000000e+00> : vector<16xf32>
    %10 = vector.multi_reduction <add>, %9, %cst_4 [1] : vector<16x32xf32> to vector<16xf32>
    %11 = vector.shape_cast %10 : vector<16xf32> to vector<16x1xf32>
    %cst_5 = arith.constant 3.125000e-02 : f32
    %12 = vector.broadcast %cst_5 : f32 to vector<16x1xf32>
    %13 = arith.mulf %8, %12 : vector<16x1xf32>
    %cst_6 = arith.constant 3.125000e-02 : f32
    %14 = vector.broadcast %cst_6 : f32 to vector<16x1xf32>
    %15 = arith.mulf %11, %14 : vector<16x1xf32>
    %16 = arith.mulf %13, %13 : vector<16x1xf32>
    %17 = arith.subf %15, %16 : vector<16x1xf32>
    %18 = vector.broadcast %13 : vector<16x1xf32> to vector<16x32xf32>
    %19 = arith.subf %1, %18 : vector<16x32xf32>
    %cst_7 = arith.constant 9.99999974E-6 : f32
    %20 = vector.broadcast %cst_7 : f32 to vector<16x1xf32>
    %21 = arith.addf %17, %20 : vector<16x1xf32>
    %22 = math.rsqrt %21 : vector<16x1xf32>
    %23 = vector.broadcast %22 : vector<16x1xf32> to vector<16x32xf32>
    %24 = arith.mulf %19, %23 : vector<16x32xf32>
    %25 = vector.broadcast %3 : vector<1x32xf32> to vector<16x32xf32>
    %26 = arith.mulf %24, %25 : vector<16x32xf32>
    %27 = vector.broadcast %4 : vector<1x32xf32> to vector<16x32xf32>
    %28 = arith.addf %26, %27 : vector<16x32xf32>
    %29 = vector.shape_cast %0 : vector<2x8x32xf32> to vector<2x1x8x32xf32>
    %30 = vector.shape_cast %29 : vector<2x1x8x32xf32> to vector<2x1x8x32xf32>
    %31 = vector.broadcast %30 : vector<2x1x8x32xf32> to vector<2x4x8x32xf32>
    %32 = vector.shape_cast %31 : vector<2x4x8x32xf32> to vector<8x8x32xf32>
    %c0_8 = arith.constant 0 : index
    %c0_9 = arith.constant 0 : index
    %c0_10 = arith.constant 0 : index
    %33 = vector.load %arg1[%c0_8, %c0_9, %c0_10] : memref<4x32x24xf32, #tpu.memory_space<vmem>>, vector<4x32x24xf32>
    %34 = vector.shape_cast %33 : vector<4x32x24xf32> to vector<1x4x32x24xf32>
    %35 = vector.shape_cast %34 : vector<1x4x32x24xf32> to vector<1x4x32x24xf32>
    %36 = vector.broadcast %35 : vector<1x4x32x24xf32> to vector<2x4x32x24xf32>
    %37 = vector.shape_cast %36 : vector<2x4x32x24xf32> to vector<8x32x24xf32>
    "tpu.trace_start"() <{level = 10 : i32, message = "gtd,gdk->gtk"}> : () -> ()
    %cst_11 = arith.constant dense<0.000000e+00> : vector<8x8x24xf32>
    %38 = tpu.matmul %32, %37, %cst_11 {dimension_numbers = #tpu.dot_dimension_numbers<[2], [1], [1], [2], [0, 0, 0, 1, 1, 2], [0], [0]>} : vector<8x8x32xf32>, vector<8x32x24xf32>, vector<8x8x24xf32> -> vector<8x8x24xf32>
    "tpu.trace_stop"() : () -> ()
    %39 = vector.extract_strided_slice %38 {offsets = [0, 0, 0], sizes = [8, 8, 8], strides = [1, 1, 1]} : vector<8x8x24xf32> to vector<8x8x8xf32>
    %40 = vector.extract_strided_slice %38 {offsets = [0, 0, 8], sizes = [8, 8, 8], strides = [1, 1, 1]} : vector<8x8x24xf32> to vector<8x8x8xf32>
    %41 = vector.extract_strided_slice %38 {offsets = [0, 0, 16], sizes = [8, 8, 8], strides = [1, 1, 1]} : vector<8x8x24xf32> to vector<8x8x8xf32>
    "tpu.trace_start"() <{level = 10 : i32, message = "gqd,gkd->gqk"}> : () -> ()
    %cst_12 = arith.constant dense<0.000000e+00> : vector<8x8x8xf32>
    %42 = tpu.matmul %39, %40, %cst_12 {dimension_numbers = #tpu.dot_dimension_numbers<[2], [2], [1], [1], [0, 0, 0, 1, 1, 1], [0], [0]>} : vector<8x8x8xf32>, vector<8x8x8xf32>, vector<8x8x8xf32> -> vector<8x8x8xf32>
    "tpu.trace_stop"() : () -> ()
    %43 = tpu.iota {dimensions = array<i32: 1>} : vector<8x8x8xi32>
    %44 = tpu.iota {dimensions = array<i32: 2>} : vector<8x8x8xi32>
    %45 = arith.cmpi sle, %44, %43 : vector<8x8x8xi32>
    %cst_13 = arith.constant -1.000000e+30 : f32
    %46 = vector.broadcast %cst_13 : f32 to vector<8x8x8xf32>
    %47 = arith.select %45, %42, %46 : vector<8x8x8xi1>, vector<8x8x8xf32>
    %cst_14 = arith.constant dense<0xFF800000> : vector<8x8xf32>
    %48 = vector.multi_reduction <maximumf>, %47, %cst_14 [2] : vector<8x8x8xf32> to vector<8x8xf32>
    %49 = vector.shape_cast %48 : vector<8x8xf32> to vector<8x8x1xf32>
    %50 = vector.broadcast %49 : vector<8x8x1xf32> to vector<8x8x8xf32>
    %51 = arith.subf %47, %50 : vector<8x8x8xf32>
    %52 = math.exp %51 : vector<8x8x8xf32>
    %cst_15 = arith.constant dense<0.000000e+00> : vector<8x8xf32>
    %53 = vector.multi_reduction <add>, %52, %cst_15 [2] : vector<8x8x8xf32> to vector<8x8xf32>
    %54 = vector.shape_cast %53 : vector<8x8xf32> to vector<8x8x1xf32>
    %55 = tpu.reciprocal %54 {approx = true} : vector<8x8x1xf32> -> vector<8x8x1xf32>
    %56 = arith.mulf %54, %55 : vector<8x8x1xf32>
    %cst_16 = arith.constant 2.000000e+00 : f32
    %57 = vector.broadcast %cst_16 : f32 to vector<8x8x1xf32>
    %58 = arith.subf %57, %56 : vector<8x8x1xf32>
    %59 = arith.mulf %55, %58 : vector<8x8x1xf32>
    %60 = vector.broadcast %59 : vector<8x8x1xf32> to vector<8x8x8xf32>
    %61 = arith.mulf %52, %60 : vector<8x8x8xf32>
    "tpu.trace_start"() <{level = 10 : i32, message = "gqk,gkd->gqd"}> : () -> ()
    %cst_17 = arith.constant dense<0.000000e+00> : vector<8x8x8xf32>
    %62 = tpu.matmul %61, %41, %cst_17 {dimension_numbers = #tpu.dot_dimension_numbers<[2], [1], [1], [2], [0, 0, 0, 1, 1, 2], [0], [0]>} : vector<8x8x8xf32>, vector<8x8x8xf32>, vector<8x8x8xf32> -> vector<8x8x8xf32>
    "tpu.trace_stop"() : () -> ()
    %c0_18 = arith.constant 0 : index
    %c0_19 = arith.constant 0 : index
    %c0_20 = arith.constant 0 : index
    %63 = vector.load %arg2[%c0_18, %c0_19, %c0_20] : memref<4x8x32xf32, #tpu.memory_space<vmem>>, vector<4x8x32xf32>
    %64 = vector.shape_cast %63 : vector<4x8x32xf32> to vector<1x4x8x32xf32>
    %65 = vector.shape_cast %64 : vector<1x4x8x32xf32> to vector<1x4x8x32xf32>
    %66 = vector.broadcast %65 : vector<1x4x8x32xf32> to vector<2x4x8x32xf32>
    %67 = vector.shape_cast %66 : vector<2x4x8x32xf32> to vector<8x8x32xf32>
    "tpu.trace_start"() <{level = 10 : i32, message = "gqd,gdm->gqm"}> : () -> ()
    %cst_21 = arith.constant dense<0.000000e+00> : vector<8x8x32xf32>
    %68 = tpu.matmul %62, %67, %cst_21 {dimension_numbers = #tpu.dot_dimension_numbers<[2], [1], [1], [2], [0, 0, 0, 1, 1, 2], [0], [0]>} : vector<8x8x8xf32>, vector<8x8x32xf32>, vector<8x8x32xf32> -> vector<8x8x32xf32>
    "tpu.trace_stop"() : () -> ()
    %69 = vector.shape_cast %68 : vector<8x8x32xf32> to vector<2x4x8x32xf32>
    %cst_22 = arith.constant dense<0.000000e+00> : vector<2x8x32xf32>
    %70 = vector.multi_reduction <add>, %69, %cst_22 [1] : vector<2x4x8x32xf32> to vector<2x8x32xf32>
    %71 = vector.shape_cast %70 : vector<2x8x32xf32> to vector<16x32xf32>
    %cst_23 = arith.constant dense<0.000000e+00> : vector<16xf32>
    %72 = vector.multi_reduction <add>, %71, %cst_23 [1] : vector<16x32xf32> to vector<16xf32>
    %73 = vector.shape_cast %72 : vector<16xf32> to vector<16x1xf32>
    %74 = arith.mulf %71, %71 : vector<16x32xf32>
    %cst_24 = arith.constant dense<0.000000e+00> : vector<16xf32>
    %75 = vector.multi_reduction <add>, %74, %cst_24 [1] : vector<16x32xf32> to vector<16xf32>
    %76 = vector.shape_cast %75 : vector<16xf32> to vector<16x1xf32>
    %cst_25 = arith.constant 3.125000e-02 : f32
    %77 = vector.broadcast %cst_25 : f32 to vector<16x1xf32>
    %78 = arith.mulf %73, %77 : vector<16x1xf32>
    %cst_26 = arith.constant 3.125000e-02 : f32
    %79 = vector.broadcast %cst_26 : f32 to vector<16x1xf32>
    %80 = arith.mulf %76, %79 : vector<16x1xf32>
    %81 = arith.mulf %78, %78 : vector<16x1xf32>
    %82 = arith.subf %80, %81 : vector<16x1xf32>
    %83 = vector.broadcast %78 : vector<16x1xf32> to vector<16x32xf32>
    %84 = arith.subf %71, %83 : vector<16x32xf32>
    %cst_27 = arith.constant 9.99999974E-6 : f32
    %85 = vector.broadcast %cst_27 : f32 to vector<16x1xf32>
    %86 = arith.addf %82, %85 : vector<16x1xf32>
    %87 = math.rsqrt %86 : vector<16x1xf32>
    %88 = vector.broadcast %87 : vector<16x1xf32> to vector<16x32xf32>
    %89 = arith.mulf %84, %88 : vector<16x32xf32>
    %90 = vector.broadcast %3 : vector<1x32xf32> to vector<16x32xf32>
    %91 = arith.mulf %89, %90 : vector<16x32xf32>
    %92 = vector.broadcast %4 : vector<1x32xf32> to vector<16x32xf32>
    %93 = arith.addf %91, %92 : vector<16x32xf32>
    %94 = arith.addf %93, %28 : vector<16x32xf32>
    %cst_28 = arith.constant dense<0.000000e+00> : vector<16xf32>
    %95 = vector.multi_reduction <add>, %94, %cst_28 [1] : vector<16x32xf32> to vector<16xf32>
    %96 = vector.shape_cast %95 : vector<16xf32> to vector<16x1xf32>
    %97 = arith.mulf %94, %94 : vector<16x32xf32>
    %cst_29 = arith.constant dense<0.000000e+00> : vector<16xf32>
    %98 = vector.multi_reduction <add>, %97, %cst_29 [1] : vector<16x32xf32> to vector<16xf32>
    %99 = vector.shape_cast %98 : vector<16xf32> to vector<16x1xf32>
    %cst_30 = arith.constant 3.125000e-02 : f32
    %100 = vector.broadcast %cst_30 : f32 to vector<16x1xf32>
    %101 = arith.mulf %96, %100 : vector<16x1xf32>
    %cst_31 = arith.constant 3.125000e-02 : f32
    %102 = vector.broadcast %cst_31 : f32 to vector<16x1xf32>
    %103 = arith.mulf %99, %102 : vector<16x1xf32>
    %104 = arith.mulf %101, %101 : vector<16x1xf32>
    %105 = arith.subf %103, %104 : vector<16x1xf32>
    %106 = vector.broadcast %101 : vector<16x1xf32> to vector<16x32xf32>
    %107 = arith.subf %94, %106 : vector<16x32xf32>
    %cst_32 = arith.constant 9.99999974E-6 : f32
    %108 = vector.broadcast %cst_32 : f32 to vector<16x1xf32>
    %109 = arith.addf %105, %108 : vector<16x1xf32>
    %110 = math.rsqrt %109 : vector<16x1xf32>
    %111 = vector.broadcast %110 : vector<16x1xf32> to vector<16x32xf32>
    %112 = arith.mulf %107, %111 : vector<16x32xf32>
    %113 = vector.broadcast %5 : vector<1x32xf32> to vector<16x32xf32>
    %114 = arith.mulf %112, %113 : vector<16x32xf32>
    %115 = vector.broadcast %6 : vector<1x32xf32> to vector<16x32xf32>
    %116 = arith.addf %114, %115 : vector<16x32xf32>
    %c0_33 = arith.constant 0 : index
    %c0_34 = arith.constant 0 : index
    %117 = vector.load %arg4[%c0_33, %c0_34] : memref<32x64xf32, #tpu.memory_space<vmem>>, vector<32x64xf32>
    %cst_35 = arith.constant dense<0.000000e+00> : vector<16x64xf32>
    %118 = tpu.matmul %94, %117, %cst_35 {dimension_numbers = #tpu.dot_dimension_numbers<[1], [0], [0], [1], [0, 0, 1, 1], [], []>} : vector<16x32xf32>, vector<32x64xf32>, vector<16x64xf32> -> vector<16x64xf32>
    %119 = vector.extract_strided_slice %118 {offsets = [0, 0], sizes = [16, 32], strides = [1, 1]} : vector<16x64xf32> to vector<16x32xf32>
    %120 = vector.extract_strided_slice %118 {offsets = [0, 32], sizes = [16, 32], strides = [1, 1]} : vector<16x64xf32> to vector<16x32xf32>
    %121 = arith.negf %119 : vector<16x32xf32>
    %122 = math.exp %121 : vector<16x32xf32>
    %cst_36 = arith.constant 1.000000e+00 : f32
    %123 = vector.broadcast %cst_36 : f32 to vector<16x32xf32>
    %124 = arith.addf %123, %122 : vector<16x32xf32>
    %125 = arith.divf %123, %124 : vector<16x32xf32>
    %126 = arith.mulf %119, %125 : vector<16x32xf32>
    %127 = arith.mulf %126, %120 : vector<16x32xf32>
    %c0_37 = arith.constant 0 : index
    %c0_38 = arith.constant 0 : index
    %128 = vector.load %arg5[%c0_37, %c0_38] : memref<32x32xf32, #tpu.memory_space<vmem>>, vector<32x32xf32>
    %cst_39 = arith.constant dense<0.000000e+00> : vector<16x32xf32>
    %129 = tpu.matmul %127, %128, %cst_39 {dimension_numbers = #tpu.dot_dimension_numbers<[1], [0], [0], [1], [0, 0, 1, 1], [], []>} : vector<16x32xf32>, vector<32x32xf32>, vector<16x32xf32> -> vector<16x32xf32>
    %cst_40 = arith.constant dense<0.000000e+00> : vector<16xf32>
    %130 = vector.multi_reduction <add>, %129, %cst_40 [1] : vector<16x32xf32> to vector<16xf32>
    %131 = vector.shape_cast %130 : vector<16xf32> to vector<16x1xf32>
    %132 = arith.mulf %129, %129 : vector<16x32xf32>
    %cst_41 = arith.constant dense<0.000000e+00> : vector<16xf32>
    %133 = vector.multi_reduction <add>, %132, %cst_41 [1] : vector<16x32xf32> to vector<16xf32>
    %134 = vector.shape_cast %133 : vector<16xf32> to vector<16x1xf32>
    %cst_42 = arith.constant 3.125000e-02 : f32
    %135 = vector.broadcast %cst_42 : f32 to vector<16x1xf32>
    %136 = arith.mulf %131, %135 : vector<16x1xf32>
    %cst_43 = arith.constant 3.125000e-02 : f32
    %137 = vector.broadcast %cst_43 : f32 to vector<16x1xf32>
    %138 = arith.mulf %134, %137 : vector<16x1xf32>
    %139 = arith.mulf %136, %136 : vector<16x1xf32>
    %140 = arith.subf %138, %139 : vector<16x1xf32>
    %141 = vector.broadcast %136 : vector<16x1xf32> to vector<16x32xf32>
    %142 = arith.subf %129, %141 : vector<16x32xf32>
    %cst_44 = arith.constant 9.99999974E-6 : f32
    %143 = vector.broadcast %cst_44 : f32 to vector<16x1xf32>
    %144 = arith.addf %140, %143 : vector<16x1xf32>
    %145 = math.rsqrt %144 : vector<16x1xf32>
    %146 = vector.broadcast %145 : vector<16x1xf32> to vector<16x32xf32>
    %147 = arith.mulf %142, %146 : vector<16x32xf32>
    %148 = vector.broadcast %5 : vector<1x32xf32> to vector<16x32xf32>
    %149 = arith.mulf %147, %148 : vector<16x32xf32>
    %150 = vector.broadcast %6 : vector<1x32xf32> to vector<16x32xf32>
    %151 = arith.addf %149, %150 : vector<16x32xf32>
    %152 = arith.addf %151, %116 : vector<16x32xf32>
    %153 = vector.shape_cast %152 : vector<16x32xf32> to vector<2x8x32xf32>
    %c0_45 = arith.constant 0 : index
    %c0_46 = arith.constant 0 : index
    %c0_47 = arith.constant 0 : index
    %154 = vector.load %arg6[%c0_45, %c0_46, %c0_47] : memref<2x8x32xf32, #tpu.memory_space<vmem>>, vector<2x8x32xf32>
    tpu.vector_store %arg6[%c0_45, %c0_46, %c0_47], %153 {strides = array<i32>} : memref<2x8x32xf32, #tpu.memory_space<vmem>>, vector<2x8x32xf32>,
    return
  }
}

</mosaic_0001>

<llo_original>
// kernel: tpu_custom_call.1
$region0: #{tpu_custom_call.1}
  #allocation0 [shape = 'u32[]', space=smem, size = 0x4, offset = 0x4, fixed_abs, tag = 'smem constant byte address 0x4 - core index']
  #allocation1 [shape = 'u32[144,128]{1,0:T(1,128)}', space=vmem, size = 0x12000, scoped, tag = 'internal scratch']
  %s0 = inlined_call_operand.vmem [shape: f32[2,8,32], index: 0, kind: input, shape index: {}]
  %s1 = inlined_call_operand.vmem [shape: f32[4,32,24], index: 1, kind: input, shape index: {}]
  %s2 = inlined_call_operand.vmem [shape: f32[4,8,32], index: 2, kind: input, shape index: {}]
  %s3 = inlined_call_operand.vmem [shape: f32[4,32], index: 3, kind: input, shape index: {}]
  %s4 = inlined_call_operand.vmem [shape: f32[32,64], index: 4, kind: input, shape index: {}]
  %s5 = inlined_call_operand.vmem [shape: f32[32,32], index: 5, kind: input, shape index: {}]
  %s6 = inlined_call_operand.hbm [shape: f32[2,8,32], index: 6, kind: output, shape index: {}]
  %s7 = sld [smem:[#allocation0]]
  $region34: #{tpu_custom_call.1} parent=0
    _
  %s9 = ssub.s32 1, %s7
  %s10 = scalar_select 0, %s9, %s7
  $region1: #{tpu_custom_call.1} parent=0
    #allocation2 [shape = 'u8[8192]{0}', space=vmem, size = 0x2000, scoped, tag = 'output window, operand 0, single buffered']
    #allocation3 [shape = 's32[1]{0}', space=sflag, size = 0x4, scoped, tag = 'scoped memory for tpu_custom_call.1']
    %11 = vsyncpa [#allocation3], 0
    // Predicated region
    $region2: #{tpu_custom_call.1} parent=1 // pred_check
      _
    $region3: #{tpu_custom_call.1} parent=1 // pred_check_branch
      %13 = sbr.rel (0) target = $region5
    $region4: #{tpu_custom_call.1} parent=1 // pred_region
      _
    $region5: #{tpu_custom_call.1} parent=1 // pred_fallthru
      _
    // Predicated region
    $region6: #{tpu_custom_call.1} parent=1 // pred_check
      _
    $region7: #{tpu_custom_call.1} parent=1 // pred_check_branch
      %15 = sbr.rel (0) target = $region9
    $region8: #{tpu_custom_call.1} parent=1 // pred_region
      _
    $region9: #{tpu_custom_call.1} parent=1 // pred_fallthru
      _
    // Predicated region
    $region10: #{tpu_custom_call.1} parent=1 // pred_check
      _
    $region11: #{tpu_custom_call.1} parent=1 // pred_check_branch
      %17 = sbr.rel (0) target = $region13
    $region12: #{tpu_custom_call.1} parent=1 // pred_region
      _
    $region13: #{tpu_custom_call.1} parent=1 // pred_fallthru
      _
    // Predicated region
    $region14: #{tpu_custom_call.1} parent=1 // pred_check
      _
    $region15: #{tpu_custom_call.1} parent=1 // pred_check_branch
      %19 = sbr.rel (0) target = $region17
    $region16: #{tpu_custom_call.1} parent=1 // pred_region
      _
    $region17: #{tpu_custom_call.1} parent=1 // pred_fallthru
      _
    // Predicated region
    $region18: #{tpu_custom_call.1} parent=1 // pred_check
      _
    $region19: #{tpu_custom_call.1} parent=1 // pred_check_branch
      %21 = sbr.rel (0) target = $region21
    $region20: #{tpu_custom_call.1} parent=1 // pred_region
      _
    $region21: #{tpu_custom_call.1} parent=1 // pred_fallthru
      _
    // Predicated region
    $region22: #{tpu_custom_call.1} parent=1 // pred_check
      _
    $region23: #{tpu_custom_call.1} parent=1 // pred_check_branch
      %23 = sbr.rel (0) target = $region25
    $region24: #{tpu_custom_call.1} parent=1 // pred_region
      _
    $region25: #{tpu_custom_call.1} parent=1 // pred_fallthru
      _
    %v24 = vld [vmem:[%s0] sm:$0xff]
    %v25 = vld [vmem:[%s0 + $0x8] sm:$0xff]
    %v26 = vld [vmem:[%s3] sm:$0xf]
    %vm27 = vcmask 261120
    %v28 = vsel %vm27, %v24, 0.0
    %29 = vadd.xlane.f32.xlu0 %v28
    %v30 = vpop.xlane.xlu0 %29
    %v31 = vsel %vm27, %v25, 0.0
    %32 = vadd.xlane.f32.xlu0 %v31
    %v33 = vpop.xlane.xlu0 %32
    %v34 = vmul.f32 %v24, %v24
    %v35 = vmul.f32 %v25, %v25
    %v36 = vsel %vm27, %v34, 0.0
    %37 = vadd.xlane.f32.xlu0 %v36
    %v38 = vpop.xlane.xlu0 %37
    %v39 = vsel %vm27, %v35, 0.0
    %40 = vadd.xlane.f32.xlu0 %v39
    %v41 = vpop.xlane.xlu0 %40
    %v42 = vmul.f32 %v30, 0.03125
    %v43 = vmul.f32 %v33, 0.03125
    %v44 = vmul.f32 %v38, 0.03125
    %v45 = vmul.f32 %v41, 0.03125
    %v46 = vmul.f32 %v42, %v42
    %v47 = vmul.f32 %v43, %v43
    %v48 = vsub.f32 %v44, %v46
    %v49 = vsub.f32 %v45, %v47
    %v50 = vsub.f32 %v24, %v42
    %v51 = vsub.f32 %v25, %v43
    %v52 = vadd.f32 %v48, 1e-05
    %v53 = vadd.f32 %v49, 1e-05
    %v54 = vrsqrt.pop %v52
    %v55 = vrsqrt.pop %v53
    %v56 = vmul.f32 %v50, %v54
    %v57 = vmul.f32 %v51, %v55
    %v58 = vlaneseq
    %v59 = vshrl.u32 %v58, 7
    %v60 = vsub.s32 0, %v59
    %v61 = vrot.slane %v26, %v60
    %v62 = vmul.f32 %v56, %v61
    %v63 = vmul.f32 %v57, %v61
    %v64 = vlaneseq
    %v65 = vshrl.u32 %v64, 7
    %v66 = vsub.s32 1, %v65
    %v67 = vrot.slane %v26, %v66
    %v68 = vadd.f32 %v62, %v67
    %v69 = vadd.f32 %v63, %v67
    %v70 = vld [vmem:[%s1] sm:$0xff]
    %v71 = vld [vmem:[%s1 + $0x8] sm:$0xff]
    %v72 = vld [vmem:[%s1 + $0x10] sm:$0xff]
    %v73 = vld [vmem:[%s1 + $0x18] sm:$0xff]
    %v74 = vld [vmem:[%s1 + $0x20] sm:$0xff]
    %v75 = vld [vmem:[%s1 + $0x28] sm:$0xff]
    %v76 = vld [vmem:[%s1 + $0x30] sm:$0xff]
    %v77 = vld [vmem:[%s1 + $0x38] sm:$0xff]
    %v78 = vld [vmem:[%s1 + $0x40] sm:$0xff]
    %v79 = vld [vmem:[%s1 + $0x48] sm:$0xff]
    %v80 = vld [vmem:[%s1 + $0x50] sm:$0xff]
    %v81 = vld [vmem:[%s1 + $0x58] sm:$0xff]
    %v82 = vld [vmem:[%s1 + $0x60] sm:$0xff]
    %v83 = vld [vmem:[%s1 + $0x68] sm:$0xff]
    %v84 = vld [vmem:[%s1 + $0x70] sm:$0xff]
    %v85 = vld [vmem:[%s1 + $0x78] sm:$0xff]
    %v87 = vsel %vm27, %v24, 0
    %89 = vmatprep.subr.mxu0 0.0
    %90 = vmatpush1.msra.mxu0 %v70
    %91 = vmatprep.subr.mxu0 0.0
    %92 = vmatpush1.msra.mxu0 %v71
    %93 = vmatprep.subr.mxu0 0.0
    %94 = vmatpush1.msra.mxu0 %v72
    %95 = vmatprep.subr.mxu0 0.0
    %96 = vmatpush1.msra.mxu0 %v73
    %97 = vmatprep.subr.mxu0 0.0
    %98 = vmatpush1.msra.mxu0 0.0
    %99 = vmatprep.subr.mxu0 0.0
    %100 = vmatpush1.msra.mxu0 0.0
    %101 = vmatprep.subr.mxu0 0.0
    %102 = vmatpush1.msra.mxu0 0.0
    %103 = vmatprep.subr.mxu0 0.0
    %104 = vmatpush1.msra.mxu0 0.0
    %105 = vmatprep.subr.mxu0 0.0
    %106 = vmatpush1.msra.mxu0 0.0
    %107 = vmatprep.subr.mxu0 0.0
    %108 = vmatpush1.msra.mxu0 0.0
    %109 = vmatprep.subr.mxu0 0.0
    %110 = vmatpush1.msra.mxu0 0.0
    %111 = vmatprep.subr.mxu0 0.0
    %112 = vmatpush1.msra.mxu0 0.0
    %113 = vmatprep.subr.mxu0 0.0
    %114 = vmatpush1.msra.mxu0 0.0
    %115 = vmatprep.subr.mxu0 0.0
    %116 = vmatpush1.msra.mxu0 0.0
    %117 = vmatprep.subr.mxu0 0.0
    %118 = vmatpush1.msra.mxu0 0.0
    %119 = vmatprep.subr.mxu0 0.0
    %120 = vmatpush1.msra.mxu0 0.0
    %121 = vmatprep.subr.mxu0 0.0
    %122 = vmatpush1.msra.mxu0 0.0
    %123 = vmatprep.subr.mxu0 0.0
    %124 = vmatpush1.msra.mxu0 0.0
    %125 = vmatprep.subr.mxu0 0.0
    %126 = vmatpush1.msra.mxu0 0.0
    %127 = vmatprep.subr.mxu0 0.0
    %128 = vmatpush1.msra.mxu0 0.0
    %129 = vmatprep.subr.mxu0 0.0
    %130 = vmatpush1.msra.mxu0 0.0
    %131 = vmatprep.subr.mxu0 0.0
    %132 = vmatpush1.msra.mxu0 0.0
    %133 = vmatprep.subr.mxu0 0.0
    %134 = vmatpush1.msra.mxu0 0.0
    %135 = vmatprep.subr.mxu0 0.0
    %136 = vmatpush1.msra.mxu0 0.0
    %137 = vmatprep.subr.mxu0 0.0
    %138 = vmatpush1.msra.mxu0 0.0
    %139 = vmatprep.subr.mxu0 0.0
    %140 = vmatpush1.msra.mxu0 0.0
    %141 = vmatprep.subr.mxu0 0.0
    %142 = vmatpush1.msra.mxu0 0.0
    %143 = vmatprep.subr.mxu0 0.0
    %144 = vmatpush1.msra.mxu0 0.0
    %145 = vmatprep.subr.mxu0 0.0
    %146 = vmatpush1.msra.mxu0 0.0
    %147 = vmatprep.subr.mxu0 0.0
    %148 = vmatpush1.msra.mxu0 0.0
    %149 = vmatprep.subr.mxu0 0.0
    %150 = vmatpush1.msra.mxu0 0.0
    %151 = vmatprep.subr.mxu0 0.0
    %152 = vmatpush1.msra.mxu0 0.0
    %153 = vmatprep.mubr.f32.mxu0 0.0
    %154 = vmatmul.mubr.f32.gmra.mrb[0].mxu0 %v87
    %v155 = vpop.f32.mrb[0].mxu0
    %v156 = vadd.f32 0.0, %v155
    %v157 = vpop.f32.mrb[0].mxu0
    %158 = vdwg.mxu0
    %159 = vmatprep.subr.mxu0 0.0
    %160 = vmatpush1.msra.mxu0 %v74
    %161 = vmatprep.subr.mxu0 0.0
    %162 = vmatpush1.msra.mxu0 %v75
    %163 = vmatprep.subr.mxu0 0.0
    %164 = vmatpush1.msra.mxu0 %v76
    %165 = vmatprep.subr.mxu0 0.0
    %166 = vmatpush1.msra.mxu0 %v77
    %167 = vmatprep.subr.mxu0 0.0
    %168 = vmatpush1.msra.mxu0 0.0
    %169 = vmatprep.subr.mxu0 0.0
    %170 = vmatpush1.msra.mxu0 0.0
    %171 = vmatprep.subr.mxu0 0.0
    %172 = vmatpush1.msra.mxu0 0.0
    %173 = vmatprep.subr.mxu0 0.0
    %174 = vmatpush1.msra.mxu0 0.0
    %175 = vmatprep.subr.mxu0 0.0
    %176 = vmatpush1.msra.mxu0 0.0
    %177 = vmatprep.subr.mxu0 0.0
    %178 = vmatpush1.msra.mxu0 0.0
    %179 = vmatprep.subr.mxu0 0.0
    %180 = vmatpush1.msra.mxu0 0.0
    %181 = vmatprep.subr.mxu0 0.0
    %182 = vmatpush1.msra.mxu0 0.0
    %183 = vmatprep.subr.mxu0 0.0
    %184 = vmatpush1.msra.mxu0 0.0
    %185 = vmatprep.subr.mxu0 0.0
    %186 = vmatpush1.msra.mxu0 0.0
    %187 = vmatprep.subr.mxu0 0.0
    %188 = vmatpush1.msra.mxu0 0.0
    %189 = vmatprep.subr.mxu0 0.0
    %190 = vmatpush1.msra.mxu0 0.0
    %191 = vmatprep.subr.mxu0 0.0
    %192 = vmatpush1.msra.mxu0 0.0
    %193 = vmatprep.subr.mxu0 0.0
    %194 = vmatpush1.msra.mxu0 0.0
    %195 = vmatprep.subr.mxu0 0.0
    %196 = vmatpush1.msra.mxu0 0.0
    %197 = vmatprep.subr.mxu0 0.0
    %198 = vmatpush1.msra.mxu0 0.0
    %199 = vmatprep.subr.mxu0 0.0
    %200 = vmatpush1.msra.mxu0 0.0
    %201 = vmatprep.subr.mxu0 0.0
    %202 = vmatpush1.msra.mxu0 0.0
    %203 = vmatprep.subr.mxu0 0.0
    %204 = vmatpush1.msra.mxu0 0.0
    %205 = vmatprep.subr.mxu0 0.0
    %206 = vmatpush1.msra.mxu0 0.0
    %207 = vmatprep.subr.mxu0 0.0
    %208 = vmatpush1.msra.mxu0 0.0
    %209 = vmatprep.subr.mxu0 0.0
    %210 = vmatpush1.msra.mxu0 0.0
    %211 = vmatprep.subr.mxu0 0.0
    %212 = vmatpush1.msra.mxu0 0.0
    %213 = vmatprep.subr.mxu0 0.0
    %214 = vmatpush1.msra.mxu0 0.0
    %215 = vmatprep.subr.mxu0 0.0
    %216 = vmatpush1.msra.mxu0 0.0
    %217 = vmatprep.subr.mxu0 0.0
    %218 = vmatpush1.msra.mxu0 0.0
    %219 = vmatprep.subr.mxu0 0.0
    %220 = vmatpush1.msra.mxu0 0.0
    %221 = vmatprep.subr.mxu0 0.0
    %222 = vmatpush1.msra.mxu0 0.0
    %223 = vmatprep.mubr.f32.mxu0 0.0
    %224 = vmatmul.mubr.f32.gmra.mrb[0].mxu0 %v87
    %v225 = vpop.f32.mrb[0].mxu0
    %v226 = vadd.f32 0.0, %v225
    %v227 = vpop.f32.mrb[0].mxu0
    %228 = vdwg.mxu0
    %229 = vmatprep.subr.mxu0 0.0
    %230 = vmatpush1.msra.mxu0 %v78
    %231 = vmatprep.subr.mxu0 0.0
    %232 = vmatpush1.msra.mxu0 %v79
    %233 = vmatprep.subr.mxu0 0.0
    %234 = vmatpush1.msra.mxu0 %v80
    %235 = vmatprep.subr.mxu0 0.0
    %236 = vmatpush1.msra.mxu0 %v81
    %237 = vmatprep.subr.mxu0 0.0
    %238 = vmatpush1.msra.mxu0 0.0
    %239 = vmatprep.subr.mxu0 0.0
    %240 = vmatpush1.msra.mxu0 0.0
    %241 = vmatprep.subr.mxu0 0.0
    %242 = vmatpush1.msra.mxu0 0.0
    %243 = vmatprep.subr.mxu0 0.0
    %244 = vmatpush1.msra.mxu0 0.0
    %245 = vmatprep.subr.mxu0 0.0
    %246 = vmatpush1.msra.mxu0 0.0
    %247 = vmatprep.subr.mxu0 0.0
    %248 = vmatpush1.msra.mxu0 0.0
    %249 = vmatprep.subr.mxu0 0.0
    %250 = vmatpush1.msra.mxu0 0.0
    %251 = vmatprep.subr.mxu0 0.0
    %252 = vmatpush1.msra.mxu0 0.0
    %253 = vmatprep.subr.mxu0 0.0
    %254 = vmatpush1.msra.mxu0 0.0
    %255 = vmatprep.subr.mxu0 0.0
    %256 = vmatpush1.msra.mxu0 0.0
    %257 = vmatprep.subr.mxu0 0.0
    %258 = vmatpush1.msra.mxu0 0.0
    %259 = vmatprep.subr.mxu0 0.0
    %260 = vmatpush1.msra.mxu0 0.0
    %261 = vmatprep.subr.mxu0 0.0
    %262 = vmatpush1.msra.mxu0 0.0
    %263 = vmatprep.subr.mxu0 0.0
    %264 = vmatpush1.msra.mxu0 0.0
    %265 = vmatprep.subr.mxu0 0.0
    %266 = vmatpush1.msra.mxu0 0.0
    %267 = vmatprep.subr.mxu0 0.0
    %268 = vmatpush1.msra.mxu0 0.0
    %269 = vmatprep.subr.mxu0 0.0
    %270 = vmatpush1.msra.mxu0 0.0
    %271 = vmatprep.subr.mxu0 0.0
    %272 = vmatpush1.msra.mxu0 0.0
    %273 = vmatprep.subr.mxu0 0.0
    %274 = vmatpush1.msra.mxu0 0.0
    %275 = vmatprep.subr.mxu0 0.0
    %276 = vmatpush1.msra.mxu0 0.0
    %277 = vmatprep.subr.mxu0 0.0
    %278 = vmatpush1.msra.mxu0 0.0
    %279 = vmatprep.subr.mxu0 0.0
    %280 = vmatpush1.msra.mxu0 0.0
    %281 = vmatprep.subr.mxu0 0.0
    %282 = vmatpush1.msra.mxu0 0.0
    %283 = vmatprep.subr.mxu0 0.0
    %284 = vmatpush1.msra.mxu0 0.0
    %285 = vmatprep.subr.mxu0 0.0
    %286 = vmatpush1.msra.mxu0 0.0
    %287 = vmatprep.subr.mxu0 0.0
    %288 = vmatpush1.msra.mxu0 0.0
    %289 = vmatprep.subr.mxu0 0.0
    %290 = vmatpush1.msra.mxu0 0.0
    %291 = vmatprep.subr.mxu0 0.0
    %292 = vmatpush1.msra.mxu0 0.0
    %293 = vmatprep.mubr.f32.mxu0 0.0
    %294 = vmatmul.mubr.f32.gmra.mrb[0].mxu0 %v87
    %v295 = vpop.f32.mrb[0].mxu0
    %v296 = vadd.f32 0.0, %v295
    %v297 = vpop.f32.mrb[0].mxu0
    %298 = vdwg.mxu0
    %299 = vmatprep.subr.mxu0 0.0
    %300 = vmatpush1.msra.mxu0 %v82
    %301 = vmatprep.subr.mxu0 0.0
    %302 = vmatpush1.msra.mxu0 %v83
    %303 = vmatprep.subr.mxu0 0.0
    %304 = vmatpush1.msra.mxu0 %v84
    %305 = vmatprep.subr.mxu0 0.0
    %306 = vmatpush1.msra.mxu0 %v85
    %307 = vmatprep.subr.mxu0 0.0
    %308 = vmatpush1.msra.mxu0 0.0
    %309 = vmatprep.subr.mxu0 0.0
    %310 = vmatpush1.msra.mxu0 0.0
    %311 = vmatprep.subr.mxu0 0.0
    %312 = vmatpush1.msra.mxu0 0.0
    %313 = vmatprep.subr.mxu0 0.0
    %314 = vmatpush1.msra.mxu0 0.0
    %315 = vmatprep.subr.mxu0 0.0
    %316 = vmatpush1.msra.mxu0 0.0
    %317 = vmatprep.subr.mxu0 0.0
    %318 = vmatpush1.msra.mxu0 0.0
    %319 = vmatprep.subr.mxu0 0.0
    %320 = vmatpush1.msra.mxu0 0.0
    %321 = vmatprep.subr.mxu0 0.0
    %322 = vmatpush1.msra.mxu0 0.0
    %323 = vmatprep.subr.mxu0 0.0
    %324 = vmatpush1.msra.mxu0 0.0
    %325 = vmatprep.subr.mxu0 0.0
    %326 = vmatpush1.msra.mxu0 0.0
    %327 = vmatprep.subr.mxu0 0.0
    %328 = vmatpush1.msra.mxu0 0.0
    %329 = vmatprep.subr.mxu0 0.0
    %330 = vmatpush1.msra.mxu0 0.0
    %331 = vmatprep.subr.mxu0 0.0
    %332 = vmatpush1.msra.mxu0 0.0
    %333 = vmatprep.subr.mxu0 0.0
    %334 = vmatpush1.msra.mxu0 0.0
    %335 = vmatprep.subr.mxu0 0.0
    %336 = vmatpush1.msra.mxu0 0.0
    %337 = vmatprep.subr.mxu0 0.0
    %338 = vmatpush1.msra.mxu0 0.0
    %339 = vmatprep.subr.mxu0 0.0
    %340 = vmatpush1.msra.mxu0 0.0
    %341 = vmatprep.subr.mxu0 0.0
    %342 = vmatpush1.msra.mxu0 0.0
    %343 = vmatprep.subr.mxu0 0.0
    %344 = vmatpush1.msra.mxu0 0.0
    %345 = vmatprep.subr.mxu0 0.0
    %346 = vmatpush1.msra.mxu0 0.0
    %347 = vmatprep.subr.mxu0 0.0
    %348 = vmatpush1.msra.mxu0 0.0
    %349 = vmatprep.subr.mxu0 0.0
    %350 = vmatpush1.msra.mxu0 0.0
    %351 = vmatprep.subr.mxu0 0.0
    %352 = vmatpush1.msra.mxu0 0.0
    %353 = vmatprep.subr.mxu0 0.0
    %354 = vmatpush1.msra.mxu0 0.0
    %355 = vmatprep.subr.mxu0 0.0
    %356 = vmatpush1.msra.mxu0 0.0
    %357 = vmatprep.subr.mxu0 0.0
    %358 = vmatpush1.msra.mxu0 0.0
    %359 = vmatprep.subr.mxu0 0.0
    %360 = vmatpush1.msra.mxu0 0.0
    %361 = vmatprep.subr.mxu0 0.0
    %362 = vmatpush1.msra.mxu0 0.0
    %363 = vmatprep.mubr.f32.mxu0 0.0
    %364 = vmatmul.mubr.f32.gmra.mrb[0].mxu0 %v87
    %v365 = vpop.f32.mrb[0].mxu0
    %v366 = vadd.f32 0.0, %v365
    %v367 = vpop.f32.mrb[0].mxu0
    %368 = vdwg.mxu0
    %v370 = vsel %vm27, %v25, 0
    %372 = vmatprep.subr.mxu0 0.0
    %373 = vmatpush1.msra.mxu0 %v70
    %374 = vmatprep.subr.mxu0 0.0
    %375 = vmatpush1.msra.mxu0 %v71
    %376 = vmatprep.subr.mxu0 0.0
    %377 = vmatpush1.msra.mxu0 %v72
    %378 = vmatprep.subr.mxu0 0.0
    %379 = vmatpush1.msra.mxu0 %v73
    %380 = vmatprep.subr.mxu0 0.0
    %381 = vmatpush1.msra.mxu0 0.0
    %382 = vmatprep.subr.mxu0 0.0
    %383 = vmatpush1.msra.mxu0 0.0
    %384 = vmatprep.subr.mxu0 0.0
    %385 = vmatpush1.msra.mxu0 0.0
    %386 = vmatprep.subr.mxu0 0.0
    %387 = vmatpush1.msra.mxu0 0.0
    %388 = vmatprep.subr.mxu0 0.0
    %389 = vmatpush1.msra.mxu0 0.0
    %390 = vmatprep.subr.mxu0 0.0
    %391 = vmatpush1.msra.mxu0 0.0
    %392 = vmatprep.subr.mxu0 0.0
    %393 = vmatpush1.msra.mxu0 0.0
    %394 = vmatprep.subr.mxu0 0.0
    %395 = vmatpush1.msra.mxu0 0.0
    %396 = vmatprep.subr.mxu0 0.0
    %397 = vmatpush1.msra.mxu0 0.0
    %398 = vmatprep.subr.mxu0 0.0
    %399 = vmatpush1.msra.mxu0 0.0
    %400 = vmatprep.subr.mxu0 0.0
    %401 = vmatpush1.msra.mxu0 0.0
    %402 = vmatprep.subr.mxu0 0.0
    %403 = vmatpush1.msra.mxu0 0.0
    %404 = vmatprep.subr.mxu0 0.0
    %405 = vmatpush1.msra.mxu0 0.0
    %406 = vmatprep.subr.mxu0 0.0
    %407 = vmatpush1.msra.mxu0 0.0
    %408 = vmatprep.subr.mxu0 0.0
    %409 = vmatpush1.msra.mxu0 0.0
    %410 = vmatprep.subr.mxu0 0.0
    %411 = vmatpush1.msra.mxu0 0.0
    %412 = vmatprep.subr.mxu0 0.0
    %413 = vmatpush1.msra.mxu0 0.0
    %414 = vmatprep.subr.mxu0 0.0
    %415 = vmatpush1.msra.mxu0 0.0
    %416 = vmatprep.subr.mxu0 0.0
    %417 = vmatpush1.msra.mxu0 0.0
    %418 = vmatprep.subr.mxu0 0.0
    %419 = vmatpush1.msra.mxu0 0.0
    %420 = vmatprep.subr.mxu0 0.0
    %421 = vmatpush1.msra.mxu0 0.0
    %422 = vmatprep.subr.mxu0 0.0
    %423 = vmatpush1.msra.mxu0 0.0
    %424 = vmatprep.subr.mxu0 0.0
    %425 = vmatpush1.msra.mxu0 0.0
    %426 = vmatprep.subr.mxu0 0.0
    %427 = vmatpush1.msra.mxu0 0.0
    %428 = vmatprep.subr.mxu0 0.0
    %429 = vmatpush1.msra.mxu0 0.0
    %430 = vmatprep.subr.mxu0 0.0
    %431 = vmatpush1.msra.mxu0 0.0
    %432 = vmatprep.subr.mxu0 0.0
    %433 = vmatpush1.msra.mxu0 0.0
    %434 = vmatprep.subr.mxu0 0.0
    %435 = vmatpush1.msra.mxu0 0.0
    %436 = vmatprep.mubr.f32.mxu0 0.0
    %437 = vmatmul.mubr.f32.gmra.mrb[0].mxu0 %v370
    %v438 = vpop.f32.mrb[0].mxu0
    %v439 = vadd.f32 0.0, %v438
    %v440 = vpop.f32.mrb[0].mxu0
    %441 = vdwg.mxu0
    %442 = vmatprep.subr.mxu0 0.0
    %443 = vmatpush1.msra.mxu0 %v74
    %444 = vmatprep.subr.mxu0 0.0
    %445 = vmatpush1.msra.mxu0 %v75
    %446 = vmatprep.subr.mxu0 0.0
    %447 = vmatpush1.msra.mxu0 %v76
    %448 = vmatprep.subr.mxu0 0.0
    %449 = vmatpush1.msra.mxu0 %v77
    %450 = vmatprep.subr.mxu0 0.0
    %451 = vmatpush1.msra.mxu0 0.0
    %452 = vmatprep.subr.mxu0 0.0
    %453 = vmatpush1.msra.mxu0 0.0
    %454 = vmatprep.subr.mxu0 0.0
    %455 = vmatpush1.msra.mxu0 0.0
    %456 = vmatprep.subr.mxu0 0.0
    %457 = vmatpush1.msra.mxu0 0.0
    %458 = vmatprep.subr.mxu0 0.0
    %459 = vmatpush1.msra.mxu0 0.0
    %460 = vmatprep.subr.mxu0 0.0
    %461 = vmatpush1.msra.mxu0 0.0
    %462 = vmatprep.subr.mxu0 0.0
    %463 = vmatpush1.msra.mxu0 0.0
    %464 = vmatprep.subr.mxu0 0.0
    %465 = vmatpush1.msra.mxu0 0.0
    %466 = vmatprep.subr.mxu0 0.0
    %467 = vmatpush1.msra.mxu0 0.0
    %468 = vmatprep.subr.mxu0 0.0
    %469 = vmatpush1.msra.mxu0 0.0
    %470 = vmatprep.subr.mxu0 0.0
    %471 = vmatpush1.msra.mxu0 0.0
    %472 = vmatprep.subr.mxu0 0.0
    %473 = vmatpush1.msra.mxu0 0.0
    %474 = vmatprep.subr.mxu0 0.0
    %475 = vmatpush1.msra.mxu0 0.0
    %476 = vmatprep.subr.mxu0 0.0
    %477 = vmatpush1.msra.mxu0 0.0
    %478 = vmatprep.subr.mxu0 0.0
    %479 = vmatpush1.msra.mxu0 0.0
    %480 = vmatprep.subr.mxu0 0.0
    %481 = vmatpush1.msra.mxu0 0.0
    %482 = vmatprep.subr.mxu0 0.0
    %483 = vmatpush1.msra.mxu0 0.0
    %484 = vmatprep.subr.mxu0 0.0
    %485 = vmatpush1.msra.mxu0 0.0
    %486 = vmatprep.subr.mxu0 0.0
    %487 = vmatpush1.msra.mxu0 0.0
    %488 = vmatprep.subr.mxu0 0.0
    %489 = vmatpush1.msra.mxu0 0.0
    %490 = vmatprep.subr.mxu0 0.0
    %491 = vmatpush1.msra.mxu0 0.0
    %492 = vmatprep.subr.mxu0 0.0
    %493 = vmatpush1.msra.mxu0 0.0
    %494 = vmatprep.subr.mxu0 0.0
    %495 = vmatpush1.msra.mxu0 0.0
    %496 = vmatprep.subr.mxu0 0.0
    %497 = vmatpush1.msra.mxu0 0.0
    %498 = vmatprep.subr.mxu0 0.0
    %499 = vmatpush1.msra.mxu0 0.0
    %500 = vmatprep.subr.mxu0 0.0
    %501 = vmatpush1.msra.mxu0 0.0
    %502 = vmatprep.subr.mxu0 0.0
    %503 = vmatpush1.msra.mxu0 0.0
    %504 = vmatprep.subr.mxu0 0.0
    %505 = vmatpush1.msra.mxu0 0.0
    %506 = vmatprep.mubr.f32.mxu0 0.0
    %507 = vmatmul.mubr.f32.gmra.mrb[0].mxu0 %v370
    %v508 = vpop.f32.mrb[0].mxu0
    %v509 = vadd.f32 0.0, %v508
    %v510 = vpop.f32.mrb[0].mxu0
    %511 = vdwg.mxu0
    %512 = vmatprep.subr.mxu0 0.0
    %513 = vmatpush1.msra.mxu0 %v78
    %514 = vmatprep.subr.mxu0 0.0
    %515 = vmatpush1.msra.mxu0 %v79
    %516 = vmatprep.subr.mxu0 0.0
    %517 = vmatpush1.msra.mxu0 %v80
    %518 = vmatprep.subr.mxu0 0.0
    %519 = vmatpush1.msra.mxu0 %v81
    %520 = vmatprep.subr.mxu0 0.0
    %521 = vmatpush1.msra.mxu0 0.0
    %522 = vmatprep.subr.mxu0 0.0
    %523 = vmatpush1.msra.mxu0 0.0
    %524 = vmatprep.subr.mxu0 0.0
    %525 = vmatpush1.msra.mxu0 0.0
    %526 = vmatprep.subr.mxu0 0.0
    %527 = vmatpush1.msra.mxu0 0.0
    %528 = vmatprep.subr.mxu0 0.0
    %529 = vmatpush1.msra.mxu0 0.0
    %530 = vmatprep.subr.mxu0 0.0
    %531 = vmatpush1.msra.mxu0 0.0
    %532 = vmatprep.subr.mxu0 0.0
    %533 = vmatpush1.msra.mxu0 0.0
    %534 = vmatprep.subr.mxu0 0.0
    %535 = vmatpush1.msra.mxu0 0.0
    %536 = vmatprep.subr.mxu0 0.0
    %537 = vmatpush1.msra.mxu0 0.0
    %538 = vmatprep.subr.mxu0 0.0
    %539 = vmatpush1.msra.mxu0 0.0
    %540 = vmatprep.subr.mxu0 0.0
    %541 = vmatpush1.msra.mxu0 0.0
    %542 = vmatprep.subr.mxu0 0.0
    %543 = vmatpush1.msra.mxu0 0.0
    %544 = vmatprep.subr.mxu0 0.0
    %545 = vmatpush1.msra.mxu0 0.0
    %546 = vmatprep.subr.mxu0 0.0
    %547 = vmatpush1.msra.mxu0 0.0
    %548 = vmatprep.subr.mxu0 0.0
    %549 = vmatpush1.msra.mxu0 0.0
    %550 = vmatprep.subr.mxu0 0.0
    %551 = vmatpush1.msra.mxu0 0.0
    %552 = vmatprep.subr.mxu0 0.0
    %553 = vmatpush1.msra.mxu0 0.0
    %554 = vmatprep.subr.mxu0 0.0
    %555 = vmatpush1.msra.mxu0 0.0
    %556 = vmatprep.subr.mxu0 0.0
    %557 = vmatpush1.msra.mxu0 0.0
    %558 = vmatprep.subr.mxu0 0.0
    %559 = vmatpush1.msra.mxu0 0.0
    %560 = vmatprep.subr.mxu0 0.0
    %561 = vmatpush1.msra.mxu0 0.0
    %562 = vmatprep.subr.mxu0 0.0
    %563 = vmatpush1.msra.mxu0 0.0
    %564 = vmatprep.subr.mxu0 0.0
    %565 = vmatpush1.msra.mxu0 0.0
    %566 = vmatprep.subr.mxu0 0.0
    %567 = vmatpush1.msra.mxu0 0.0
    %568 = vmatprep.subr.mxu0 0.0
    %569 = vmatpush1.msra.mxu0 0.0
    %570 = vmatprep.subr.mxu0 0.0
    %571 = vmatpush1.msra.mxu0 0.0
    %572 = vmatprep.subr.mxu0 0.0
    %573 = vmatpush1.msra.mxu0 0.0
    %574 = vmatprep.subr.mxu0 0.0
    %575 = vmatpush1.msra.mxu0 0.0
    %576 = vmatprep.mubr.f32.mxu0 0.0
    %577 = vmatmul.mubr.f32.gmra.mrb[0].mxu0 %v370
    %v578 = vpop.f32.mrb[0].mxu0
    %v579 = vadd.f32 0.0, %v578
    %v580 = vpop.f32.mrb[0].mxu0
    %581 = vdwg.mxu0
    %582 = vmatprep.subr.mxu0 0.0
    %583 = vmatpush1.msra.mxu0 %v82
    %584 = vmatprep.subr.mxu0 0.0
    %585 = vmatpush1.msra.mxu0 %v83
    %586 = vmatprep.subr.mxu0 0.0
    %587 = vmatpush1.msra.mxu0 %v84
    %588 = vmatprep.subr.mxu0 0.0
    %589 = vmatpush1.msra.mxu0 %v85
    %590 = vmatprep.subr.mxu0 0.0
    %591 = vmatpush1.msra.mxu0 0.0
    %592 = vmatprep.subr.mxu0 0.0
    %593 = vmatpush1.msra.mxu0 0.0
    %594 = vmatprep.subr.mxu0 0.0
    %595 = vmatpush1.msra.mxu0 0.0
    %596 = vmatprep.subr.mxu0 0.0
    %597 = vmatpush1.msra.mxu0 0.0
    %598 = vmatprep.subr.mxu0 0.0
    %599 = vmatpush1.msra.mxu0 0.0
    %600 = vmatprep.subr.mxu0 0.0
    %601 = vmatpush1.msra.mxu0 0.0
    %602 = vmatprep.subr.mxu0 0.0
    %603 = vmatpush1.msra.mxu0 0.0
    %604 = vmatprep.subr.mxu0 0.0
    %605 = vmatpush1.msra.mxu0 0.0
    %606 = vmatprep.subr.mxu0 0.0
    %607 = vmatpush1.msra.mxu0 0.0
    %608 = vmatprep.subr.mxu0 0.0
    %609 = vmatpush1.msra.mxu0 0.0
    %610 = vmatprep.subr.mxu0 0.0
    %611 = vmatpush1.msra.mxu0 0.0
    %612 = vmatprep.subr.mxu0 0.0
    %613 = vmatpush1.msra.mxu0 0.0
    %614 = vmatprep.subr.mxu0 0.0
    %615 = vmatpush1.msra.mxu0 0.0
    %616 = vmatprep.subr.mxu0 0.0
    %617 = vmatpush1.msra.mxu0 0.0
    %618 = vmatprep.subr.mxu0 0.0
    %619 = vmatpush1.msra.mxu0 0.0
    %620 = vmatprep.subr.mxu0 0.0
    %621 = vmatpush1.msra.mxu0 0.0
    %622 = vmatprep.subr.mxu0 0.0
    %623 = vmatpush1.msra.mxu0 0.0
    %624 = vmatprep.subr.mxu0 0.0
    %625 = vmatpush1.msra.mxu0 0.0
    %626 = vmatprep.subr.mxu0 0.0
    %627 = vmatpush1.msra.mxu0 0.0
    %628 = vmatprep.subr.mxu0 0.0
    %629 = vmatpush1.msra.mxu0 0.0
    %630 = vmatprep.subr.mxu0 0.0
    %631 = vmatpush1.msra.mxu0 0.0
    %632 = vmatprep.subr.mxu0 0.0
    %633 = vmatpush1.msra.mxu0 0.0
    %634 = vmatprep.subr.mxu0 0.0
    %635 = vmatpush1.msra.mxu0 0.0
    %636 = vmatprep.subr.mxu0 0.0
    %637 = vmatpush1.msra.mxu0 0.0
    %638 = vmatprep.subr.mxu0 0.0
    %639 = vmatpush1.msra.mxu0 0.0
    %640 = vmatprep.subr.mxu0 0.0
    %641 = vmatpush1.msra.mxu0 0.0
    %642 = vmatprep.subr.mxu0 0.0
    %643 = vmatpush1.msra.mxu0 0.0
    %644 = vmatprep.subr.mxu0 0.0
    %645 = vmatpush1.msra.mxu0 0.0
    %646 = vmatprep.mubr.f32.mxu0 0.0
    %647 = vmatmul.mubr.f32.gmra.mrb[0].mxu0 %v370
    %v648 = vpop.f32.mrb[0].mxu0
    %v649 = vadd.f32 0.0, %v648
    %v650 = vpop.f32.mrb[0].mxu0
    %651 = vdwg.mxu0
    %653 = vrot.lane.b32.xlu0 %v156, 120
    %v654 = vpop.permute.xlu0 %653
    %vm655 = vcmask 64512
    %v656 = vsel %vm655, %v156, 0
    %v658 = vsel %vm655, %v654, 0
    %660 = vmatprep.subr.mxu0 0.0
    %661 = vmatpush1.xpose.msra.mxu0 %v658
    %662 = vmatprep.subr.mxu0 0.0
    %663 = vmatpush1.xpose.msra.mxu0 0.0
    %664 = vmatprep.subr.mxu0 0.0
    %665 = vmatpush1.xpose.msra.mxu0 0.0
    %666 = vmatprep.subr.mxu0 0.0
    %667 = vmatpush1.xpose.msra.mxu0 0.0
    %668 = vmatprep.subr.mxu0 0.0
    %669 = vmatpush1.xpose.msra.mxu0 0.0
    %670 = vmatprep.subr.mxu0 0.0
    %671 = vmatpush1.xpose.msra.mxu0 0.0
    %672 = vmatprep.subr.mxu0 0.0
    %673 = vmatpush1.xpose.msra.mxu0 0.0
    %674 = vmatprep.subr.mxu0 0.0
    %675 = vmatpush1.xpose.msra.mxu0 0.0
    %676 = vmatprep.subr.mxu0 0.0
    %677 = vmatpush1.xpose.msra.mxu0 0.0
    %678 = vmatprep.subr.mxu0 0.0
    %679 = vmatpush1.xpose.msra.mxu0 0.0
    %680 = vmatprep.subr.mxu0 0.0
    %681 = vmatpush1.xpose.msra.mxu0 0.0
    %682 = vmatprep.subr.mxu0 0.0
    %683 = vmatpush1.xpose.msra.mxu0 0.0
    %684 = vmatprep.subr.mxu0 0.0
    %685 = vmatpush1.xpose.msra.mxu0 0.0
    %686 = vmatprep.subr.mxu0 0.0
    %687 = vmatpush1.xpose.msra.mxu0 0.0
    %688 = vmatprep.subr.mxu0 0.0
    %689 = vmatpush1.xpose.msra.mxu0 0.0
    %690 = vmatprep.subr.mxu0 0.0
    %691 = vmatpush1.xpose.msra.mxu0 0.0
    %692 = vmatprep.subr.mxu0 0.0
    %693 = vmatpush1.xpose.msra.mxu0 0.0
    %694 = vmatprep.subr.mxu0 0.0
    %695 = vmatpush1.xpose.msra.mxu0 0.0
    %696 = vmatprep.subr.mxu0 0.0
    %697 = vmatpush1.xpose.msra.mxu0 0.0
    %698 = vmatprep.subr.mxu0 0.0
    %699 = vmatpush1.xpose.msra.mxu0 0.0
    %700 = vmatprep.subr.mxu0 0.0
    %701 = vmatpush1.xpose.msra.mxu0 0.0
    %702 = vmatprep.subr.mxu0 0.0
    %703 = vmatpush1.xpose.msra.mxu0 0.0
    %704 = vmatprep.subr.mxu0 0.0
    %705 = vmatpush1.xpose.msra.mxu0 0.0
    %706 = vmatprep.subr.mxu0 0.0
    %707 = vmatpush1.xpose.msra.mxu0 0.0
    %708 = vmatprep.subr.mxu0 0.0
    %709 = vmatpush1.xpose.msra.mxu0 0.0
    %710 = vmatprep.subr.mxu0 0.0
    %711 = vmatpush1.xpose.msra.mxu0 0.0
    %712 = vmatprep.subr.mxu0 0.0
    %713 = vmatpush1.xpose.msra.mxu0 0.0
    %714 = vmatprep.subr.mxu0 0.0
    %715 = vmatpush1.xpose.msra.mxu0 0.0
    %716 = vmatprep.subr.mxu0 0.0
    %717 = vmatpush1.xpose.msra.mxu0 0.0
    %718 = vmatprep.subr.mxu0 0.0
    %719 = vmatpush1.xpose.msra.mxu0 0.0
    %720 = vmatprep.subr.mxu0 0.0
    %721 = vmatpush1.xpose.msra.mxu0 0.0
    %722 = vmatprep.subr.mxu0 0.0
    %723 = vmatpush1.xpose.msra.mxu0 0.0
    %724 = vmatprep.mubr.f32.mxu0 0.0
    %725 = vmatmul.mubr.f32.gmra.mrb[0].mxu0 %v656
    %v726 = vpop.f32.mrb[0].mxu0
    %v727 = vadd.f32 0.0, %v726
    %v728 = vpop.f32.mrb[0].mxu0
    %729 = vdwg.mxu0
    %731 = vrot.lane.b32.xlu0 %v226, 120
    %v732 = vpop.permute.xlu0 %731
    %v733 = vsel %vm655, %v226, 0
    %v735 = vsel %vm655, %v732, 0
    %737 = vmatprep.subr.mxu0 0.0
    %738 = vmatpush1.xpose.msra.mxu0 %v735
    %739 = vmatprep.subr.mxu0 0.0
    %740 = vmatpush1.xpose.msra.mxu0 0.0
    %741 = vmatprep.subr.mxu0 0.0
    %742 = vmatpush1.xpose.msra.mxu0 0.0
    %743 = vmatprep.subr.mxu0 0.0
    %744 = vmatpush1.xpose.msra.mxu0 0.0
    %745 = vmatprep.subr.mxu0 0.0
    %746 = vmatpush1.xpose.msra.mxu0 0.0
    %747 = vmatprep.subr.mxu0 0.0
    %748 = vmatpush1.xpose.msra.mxu0 0.0
    %749 = vmatprep.subr.mxu0 0.0
    %750 = vmatpush1.xpose.msra.mxu0 0.0
    %751 = vmatprep.subr.mxu0 0.0
    %752 = vmatpush1.xpose.msra.mxu0 0.0
    %753 = vmatprep.subr.mxu0 0.0
    %754 = vmatpush1.xpose.msra.mxu0 0.0
    %755 = vmatprep.subr.mxu0 0.0
    %756 = vmatpush1.xpose.msra.mxu0 0.0
    %757 = vmatprep.subr.mxu0 0.0
    %758 = vmatpush1.xpose.msra.mxu0 0.0
    %759 = vmatprep.subr.mxu0 0.0
    %760 = vmatpush1.xpose.msra.mxu0 0.0
    %761 = vmatprep.subr.mxu0 0.0
    %762 = vmatpush1.xpose.msra.mxu0 0.0
    %763 = vmatprep.subr.mxu0 0.0
    %764 = vmatpush1.xpose.msra.mxu0 0.0
    %765 = vmatprep.subr.mxu0 0.0
    %766 = vmatpush1.xpose.msra.mxu0 0.0
    %767 = vmatprep.subr.mxu0 0.0
    %768 = vmatpush1.xpose.msra.mxu0 0.0
    %769 = vmatprep.subr.mxu0 0.0
    %770 = vmatpush1.xpose.msra.mxu0 0.0
    %771 = vmatprep.subr.mxu0 0.0
    %772 = vmatpush1.xpose.msra.mxu0 0.0
    %773 = vmatprep.subr.mxu0 0.0
    %774 = vmatpush1.xpose.msra.mxu0 0.0
    %775 = vmatprep.subr.mxu0 0.0
    %776 = vmatpush1.xpose.msra.mxu0 0.0
    %777 = vmatprep.subr.mxu0 0.0
    %778 = vmatpush1.xpose.msra.mxu0 0.0
    %779 = vmatprep.subr.mxu0 0.0
    %780 = vmatpush1.xpose.msra.mxu0 0.0
    %781 = vmatprep.subr.mxu0 0.0
    %782 = vmatpush1.xpose.msra.mxu0 0.0
    %783 = vmatprep.subr.mxu0 0.0
    %784 = vmatpush1.xpose.msra.mxu0 0.0
    %785 = vmatprep.subr.mxu0 0.0
    %786 = vmatpush1.xpose.msra.mxu0 0.0
    %787 = vmatprep.subr.mxu0 0.0
    %788 = vmatpush1.xpose.msra.mxu0 0.0
    %789 = vmatprep.subr.mxu0 0.0
    %790 = vmatpush1.xpose.msra.mxu0 0.0
    %791 = vmatprep.subr.mxu0 0.0
    %792 = vmatpush1.xpose.msra.mxu0 0.0
    %793 = vmatprep.subr.mxu0 0.0
    %794 = vmatpush1.xpose.msra.mxu0 0.0
    %795 = vmatprep.subr.mxu0 0.0
    %796 = vmatpush1.xpose.msra.mxu0 0.0
    %797 = vmatprep.subr.mxu0 0.0
    %798 = vmatpush1.xpose.msra.mxu0 0.0
    %799 = vmatprep.subr.mxu0 0.0
    %800 = vmatpush1.xpose.msra.mxu0 0.0
    %801 = vmatprep.mubr.f32.mxu0 0.0
    %802 = vmatmul.mubr.f32.gmra.mrb[0].mxu0 %v733
    %v803 = vpop.f32.mrb[0].mxu0
    %v804 = vadd.f32 0.0, %v803
    %v805 = vpop.f32.mrb[0].mxu0
    %806 = vdwg.mxu0
    %808 = vrot.lane.b32.xlu0 %v296, 120
    %v809 = vpop.permute.xlu0 %808
    %v810 = vsel %vm655, %v296, 0
    %v812 = vsel %vm655, %v809, 0
    %814 = vmatprep.subr.mxu0 0.0
    %815 = vmatpush1.xpose.msra.mxu0 %v812
    %816 = vmatprep.subr.mxu0 0.0
    %817 = vmatpush1.xpose.msra.mxu0 0.0
    %818 = vmatprep.subr.mxu0 0.0
    %819 = vmatpush1.xpose.msra.mxu0 0.0
    %820 = vmatprep.subr.mxu0 0.0
    %821 = vmatpush1.xpose.msra.mxu0 0.0
    %822 = vmatprep.subr.mxu0 0.0
    %823 = vmatpush1.xpose.msra.mxu0 0.0
    %824 = vmatprep.subr.mxu0 0.0
    %825 = vmatpush1.xpose.msra.mxu0 0.0
    %826 = vmatprep.subr.mxu0 0.0
    %827 = vmatpush1.xpose.msra.mxu0 0.0
    %828 = vmatprep.subr.mxu0 0.0
    %829 = vmatpush1.xpose.msra.mxu0 0.0
    %830 = vmatprep.subr.mxu0 0.0
    %831 = vmatpush1.xpose.msra.mxu0 0.0
    %832 = vmatprep.subr.mxu0 0.0
    %833 = vmatpush1.xpose.msra.mxu0 0.0
    %834 = vmatprep.subr.mxu0 0.0
    %835 = vmatpush1.xpose.msra.mxu0 0.0
    %836 = vmatprep.subr.mxu0 0.0
    %837 = vmatpush1.xpose.msra.mxu0 0.0
    %838 = vmatprep.subr.mxu0 0.0
    %839 = vmatpush1.xpose.msra.mxu0 0.0
    %840 = vmatprep.subr.mxu0 0.0
    %841 = vmatpush1.xpose.msra.mxu0 0.0
    %842 = vmatprep.subr.mxu0 0.0
    %843 = vmatpush1.xpose.msra.mxu0 0.0
    %844 = vmatprep.subr.mxu0 0.0
    %845 = vmatpush1.xpose.msra.mxu0 0.0
    %846 = vmatprep.subr.mxu0 0.0
    %847 = vmatpush1.xpose.msra.mxu0 0.0
    %848 = vmatprep.subr.mxu0 0.0
    %849 = vmatpush1.xpose.msra.mxu0 0.0
    %850 = vmatprep.subr.mxu0 0.0
    %851 = vmatpush1.xpose.msra.mxu0 0.0
    %852 = vmatprep.subr.mxu0 0.0
    %853 = vmatpush1.xpose.msra.mxu0 0.0
    %854 = vmatprep.subr.mxu0 0.0
    %855 = vmatpush1.xpose.msra.mxu0 0.0
    %856 = vmatprep.subr.mxu0 0.0
    %857 = vmatpush1.xpose.msra.mxu0 0.0
    %858 = vmatprep.subr.mxu0 0.0
    %859 = vmatpush1.xpose.msra.mxu0 0.0
    %860 = vmatprep.subr.mxu0 0.0
    %861 = vmatpush1.xpose.msra.mxu0 0.0
    %862 = vmatprep.subr.mxu0 0.0
    %863 = vmatpush1.xpose.msra.mxu0 0.0
    %864 = vmatprep.subr.mxu0 0.0
    %865 = vmatpush1.xpose.msra.mxu0 0.0
    %866 = vmatprep.subr.mxu0 0.0
    %867 = vmatpush1.xpose.msra.mxu0 0.0
    %868 = vmatprep.subr.mxu0 0.0
    %869 = vmatpush1.xpose.msra.mxu0 0.0
    %870 = vmatprep.subr.mxu0 0.0
    %871 = vmatpush1.xpose.msra.mxu0 0.0
    %872 = vmatprep.subr.mxu0 0.0
    %873 = vmatpush1.xpose.msra.mxu0 0.0
    %874 = vmatprep.subr.mxu0 0.0
    %875 = vmatpush1.xpose.msra.mxu0 0.0
    %876 = vmatprep.subr.mxu0 0.0
    %877 = vmatpush1.xpose.msra.mxu0 0.0
    %878 = vmatprep.mubr.f32.mxu0 0.0
    %879 = vmatmul.mubr.f32.gmra.mrb[0].mxu0 %v810
    %v880 = vpop.f32.mrb[0].mxu0
    %v881 = vadd.f32 0.0, %v880
    %v882 = vpop.f32.mrb[0].mxu0
    %883 = vdwg.mxu0
    %885 = vrot.lane.b32.xlu0 %v366, 120
    %v886 = vpop.permute.xlu0 %885
    %v887 = vsel %vm655, %v366, 0
    %v889 = vsel %vm655, %v886, 0
    %891 = vmatprep.subr.mxu0 0.0
    %892 = vmatpush1.xpose.msra.mxu0 %v889
    %893 = vmatprep.subr.mxu0 0.0
    %894 = vmatpush1.xpose.msra.mxu0 0.0
    %895 = vmatprep.subr.mxu0 0.0
    %896 = vmatpush1.xpose.msra.mxu0 0.0
    %897 = vmatprep.subr.mxu0 0.0
    %898 = vmatpush1.xpose.msra.mxu0 0.0
    %899 = vmatprep.subr.mxu0 0.0
    %900 = vmatpush1.xpose.msra.mxu0 0.0
    %901 = vmatprep.subr.mxu0 0.0
    %902 = vmatpush1.xpose.msra.mxu0 0.0
    %903 = vmatprep.subr.mxu0 0.0
    %904 = vmatpush1.xpose.msra.mxu0 0.0
    %905 = vmatprep.subr.mxu0 0.0
    %906 = vmatpush1.xpose.msra.mxu0 0.0
    %907 = vmatprep.subr.mxu0 0.0
    %908 = vmatpush1.xpose.msra.mxu0 0.0
    %909 = vmatprep.subr.mxu0 0.0
    %910 = vmatpush1.xpose.msra.mxu0 0.0
    %911 = vmatprep.subr.mxu0 0.0
    %912 = vmatpush1.xpose.msra.mxu0 0.0
    %913 = vmatprep.subr.mxu0 0.0
    %914 = vmatpush1.xpose.msra.mxu0 0.0
    %915 = vmatprep.subr.mxu0 0.0
    %916 = vmatpush1.xpose.msra.mxu0 0.0
    %917 = vmatprep.subr.mxu0 0.0
    %918 = vmatpush1.xpose.msra.mxu0 0.0
    %919 = vmatprep.subr.mxu0 0.0
    %920 = vmatpush1.xpose.msra.mxu0 0.0
    %921 = vmatprep.subr.mxu0 0.0
    %922 = vmatpush1.xpose.msra.mxu0 0.0
    %923 = vmatprep.subr.mxu0 0.0
    %924 = vmatpush1.xpose.msra.mxu0 0.0
    %925 = vmatprep.subr.mxu0 0.0
    %926 = vmatpush1.xpose.msra.mxu0 0.0
    %927 = vmatprep.subr.mxu0 0.0
    %928 = vmatpush1.xpose.msra.mxu0 0.0
    %929 = vmatprep.subr.mxu0 0.0
    %930 = vmatpush1.xpose.msra.mxu0 0.0
    %931 = vmatprep.subr.mxu0 0.0
    %932 = vmatpush1.xpose.msra.mxu0 0.0
    %933 = vmatprep.subr.mxu0 0.0
    %934 = vmatpush1.xpose.msra.mxu0 0.0
    %935 = vmatprep.subr.mxu0 0.0
    %936 = vmatpush1.xpose.msra.mxu0 0.0
    %937 = vmatprep.subr.mxu0 0.0
    %938 = vmatpush1.xpose.msra.mxu0 0.0
    %939 = vmatprep.subr.mxu0 0.0
    %940 = vmatpush1.xpose.msra.mxu0 0.0
    %941 = vmatprep.subr.mxu0 0.0
    %942 = vmatpush1.xpose.msra.mxu0 0.0
    %943 = vmatprep.subr.mxu0 0.0
    %944 = vmatpush1.xpose.msra.mxu0 0.0
    %945 = vmatprep.subr.mxu0 0.0
    %946 = vmatpush1.xpose.msra.mxu0 0.0
    %947 = vmatprep.subr.mxu0 0.0
    %948 = vmatpush1.xpose.msra.mxu0 0.0
    %949 = vmatprep.subr.mxu0 0.0
    %950 = vmatpush1.xpose.msra.mxu0 0.0
    %951 = vmatprep.subr.mxu0 0.0
    %952 = vmatpush1.xpose.msra.mxu0 0.0
    %953 = vmatprep.subr.mxu0 0.0
    %954 = vmatpush1.xpose.msra.mxu0 0.0
    %955 = vmatprep.mubr.f32.mxu0 0.0
    %956 = vmatmul.mubr.f32.gmra.mrb[0].mxu0 %v887
    %v957 = vpop.f32.mrb[0].mxu0
    %v958 = vadd.f32 0.0, %v957
    %v959 = vpop.f32.mrb[0].mxu0
    %960 = vdwg.mxu0
    %962 = vrot.lane.b32.xlu0 %v439, 120
    %v963 = vpop.permute.xlu0 %962
    %v964 = vsel %vm655, %v439, 0
    %v966 = vsel %vm655, %v963, 0
    %968 = vmatprep.subr.mxu0 0.0
    %969 = vmatpush1.xpose.msra.mxu0 %v966
    %970 = vmatprep.subr.mxu0 0.0
    %971 = vmatpush1.xpose.msra.mxu0 0.0
    %972 = vmatprep.subr.mxu0 0.0
    %973 = vmatpush1.xpose.msra.mxu0 0.0
    %974 = vmatprep.subr.mxu0 0.0
    %975 = vmatpush1.xpose.msra.mxu0 0.0
    %976 = vmatprep.subr.mxu0 0.0
    %977 = vmatpush1.xpose.msra.mxu0 0.0
    %978 = vmatprep.subr.mxu0 0.0
    %979 = vmatpush1.xpose.msra.mxu0 0.0
    %980 = vmatprep.subr.mxu0 0.0
    %981 = vmatpush1.xpose.msra.mxu0 0.0
    %982 = vmatprep.subr.mxu0 0.0
    %983 = vmatpush1.xpose.msra.mxu0 0.0
    %984 = vmatprep.subr.mxu0 0.0
    %985 = vmatpush1.xpose.msra.mxu0 0.0
    %986 = vmatprep.subr.mxu0 0.0
    %987 = vmatpush1.xpose.msra.mxu0 0.0
    %988 = vmatprep.subr.mxu0 0.0
    %989 = vmatpush1.xpose.msra.mxu0 0.0
    %990 = vmatprep.subr.mxu0 0.0
    %991 = vmatpush1.xpose.msra.mxu0 0.0
    %992 = vmatprep.subr.mxu0 0.0
    %993 = vmatpush1.xpose.msra.mxu0 0.0
    %994 = vmatprep.subr.mxu0 0.0
    %995 = vmatpush1.xpose.msra.mxu0 0.0
    %996 = vmatprep.subr.mxu0 0.0
    %997 = vmatpush1.xpose.msra.mxu0 0.0
    %998 = vmatprep.subr.mxu0 0.0
    %999 = vmatpush1.xpose.msra.mxu0 0.0
    %1000 = vmatprep.subr.mxu0 0.0
    %1001 = vmatpush1.xpose.msra.mxu0 0.0
    %1002 = vmatprep.subr.mxu0 0.0
    %1003 = vmatpush1.xpose.msra.mxu0 0.0
    %1004 = vmatprep.subr.mxu0 0.0
    %1005 = vmatpush1.xpose.msra.mxu0 0.0
    %1006 = vmatprep.subr.mxu0 0.0
    %1007 = vmatpush1.xpose.msra.mxu0 0.0
    %1008 = vmatprep.subr.mxu0 0.0
    %1009 = vmatpush1.xpose.msra.mxu0 0.0
    %1010 = vmatprep.subr.mxu0 0.0
    %1011 = vmatpush1.xpose.msra.mxu0 0.0
    %1012 = vmatprep.subr.mxu0 0.0
    %1013 = vmatpush1.xpose.msra.mxu0 0.0
    %1014 = vmatprep.subr.mxu0 0.0
    %1015 = vmatpush1.xpose.msra.mxu0 0.0
    %1016 = vmatprep.subr.mxu0 0.0
    %1017 = vmatpush1.xpose.msra.mxu0 0.0
    %1018 = vmatprep.subr.mxu0 0.0
    %1019 = vmatpush1.xpose.msra.mxu0 0.0
    %1020 = vmatprep.subr.mxu0 0.0
    %1021 = vmatpush1.xpose.msra.mxu0 0.0
    %1022 = vmatprep.subr.mxu0 0.0
    %1023 = vmatpush1.xpose.msra.mxu0 0.0
    %1024 = vmatprep.subr.mxu0 0.0
    %1025 = vmatpush1.xpose.msra.mxu0 0.0
    %1026 = vmatprep.subr.mxu0 0.0
    %1027 = vmatpush1.xpose.msra.mxu0 0.0
    %1028 = vmatprep.subr.mxu0 0.0
    %1029 = vmatpush1.xpose.msra.mxu0 0.0
    %1030 = vmatprep.subr.mxu0 0.0
    %1031 = vmatpush1.xpose.msra.mxu0 0.0
    %1032 = vmatprep.mubr.f32.mxu0 0.0
    %1033 = vmatmul.mubr.f32.gmra.mrb[0].mxu0 %v964
    %v1034 = vpop.f32.mrb[0].mxu0
    %v1035 = vadd.f32 0.0, %v1034
    %v1036 = vpop.f32.mrb[0].mxu0
    %1037 = vdwg.mxu0
    %1039 = vrot.lane.b32.xlu0 %v509, 120
    %v1040 = vpop.permute.xlu0 %1039
    %v1041 = vsel %vm655, %v509, 0
    %v1043 = vsel %vm655, %v1040, 0
    %1045 = vmatprep.subr.mxu0 0.0
    %1046 = vmatpush1.xpose.msra.mxu0 %v1043
    %1047 = vmatprep.subr.mxu0 0.0
    %1048 = vmatpush1.xpose.msra.mxu0 0.0
    %1049 = vmatprep.subr.mxu0 0.0
    %1050 = vmatpush1.xpose.msra.mxu0 0.0
    %1051 = vmatprep.subr.mxu0 0.0
    %1052 = vmatpush1.xpose.msra.mxu0 0.0
    %1053 = vmatprep.subr.mxu0 0.0
    %1054 = vmatpush1.xpose.msra.mxu0 0.0
    %1055 = vmatprep.subr.mxu0 0.0
    %1056 = vmatpush1.xpose.msra.mxu0 0.0
    %1057 = vmatprep.subr.mxu0 0.0
    %1058 = vmatpush1.xpose.msra.mxu0 0.0
    %1059 = vmatprep.subr.mxu0 0.0
    %1060 = vmatpush1.xpose.msra.mxu0 0.0
    %1061 = vmatprep.subr.mxu0 0.0
    %1062 = vmatpush1.xpose.msra.mxu0 0.0
    %1063 = vmatprep.subr.mxu0 0.0
    %1064 = vmatpush1.xpose.msra.mxu0 0.0
    %1065 = vmatprep.subr.mxu0 0.0
    %1066 = vmatpush1.xpose.msra.mxu0 0.0
    %1067 = vmatprep.subr.mxu0 0.0
    %1068 = vmatpush1.xpose.msra.mxu0 0.0
    %1069 = vmatprep.subr.mxu0 0.0
    %1070 = vmatpush1.xpose.msra.mxu0 0.0
    %1071 = vmatprep.subr.mxu0 0.0
    %1072 = vmatpush1.xpose.msra.mxu0 0.0
    %1073 = vmatprep.subr.mxu0 0.0
    %1074 = vmatpush1.xpose.msra.mxu0 0.0
    %1075 = vmatprep.subr.mxu0 0.0
    %1076 = vmatpush1.xpose.msra.mxu0 0.0
    %1077 = vmatprep.subr.mxu0 0.0
    %1078 = vmatpush1.xpose.msra.mxu0 0.0
    %1079 = vmatprep.subr.mxu0 0.0
    %1080 = vmatpush1.xpose.msra.mxu0 0.0
    %1081 = vmatprep.subr.mxu0 0.0
    %1082 = vmatpush1.xpose.msra.mxu0 0.0
    %1083 = vmatprep.subr.mxu0 0.0
    %1084 = vmatpush1.xpose.msra.mxu0 0.0
    %1085 = vmatprep.subr.mxu0 0.0
    %1086 = vmatpush1.xpose.msra.mxu0 0.0
    %1087 = vmatprep.subr.mxu0 0.0
    %1088 = vmatpush1.xpose.msra.mxu0 0.0
    %1089 = vmatprep.subr.mxu0 0.0
    %1090 = vmatpush1.xpose.msra.mxu0 0.0
    %1091 = vmatprep.subr.mxu0 0.0
    %1092 = vmatpush1.xpose.msra.mxu0 0.0
    %1093 = vmatprep.subr.mxu0 0.0
    %1094 = vmatpush1.xpose.msra.mxu0 0.0
    %1095 = vmatprep.subr.mxu0 0.0
    %1096 = vmatpush1.xpose.msra.mxu0 0.0
    %1097 = vmatprep.subr.mxu0 0.0
    %1098 = vmatpush1.xpose.msra.mxu0 0.0
    %1099 = vmatprep.subr.mxu0 0.0
    %1100 = vmatpush1.xpose.msra.mxu0 0.0
    %1101 = vmatprep.subr.mxu0 0.0
    %1102 = vmatpush1.xpose.msra.mxu0 0.0
    %1103 = vmatprep.subr.mxu0 0.0
    %1104 = vmatpush1.xpose.msra.mxu0 0.0
    %1105 = vmatprep.subr.mxu0 0.0
    %1106 = vmatpush1.xpose.msra.mxu0 0.0
    %1107 = vmatprep.subr.mxu0 0.0
    %1108 = vmatpush1.xpose.msra.mxu0 0.0
    %1109 = vmatprep.mubr.f32.mxu0 0.0
    %1110 = vmatmul.mubr.f32.gmra.mrb[0].mxu0 %v1041
    %v1111 = vpop.f32.mrb[0].mxu0
    %v1112 = vadd.f32 0.0, %v1111
    %v1113 = vpop.f32.mrb[0].mxu0
    %1114 = vdwg.mxu0
    %1116 = vrot.lane.b32.xlu0 %v579, 120
    %v1117 = vpop.permute.xlu0 %1116
    %v1118 = vsel %vm655, %v579, 0
    %v1120 = vsel %vm655, %v1117, 0
    %1122 = vmatprep.subr.mxu0 0.0
    %1123 = vmatpush1.xpose.msra.mxu0 %v1120
    %1124 = vmatprep.subr.mxu0 0.0
    %1125 = vmatpush1.xpose.msra.mxu0 0.0
    %1126 = vmatprep.subr.mxu0 0.0
    %1127 = vmatpush1.xpose.msra.mxu0 0.0
    %1128 = vmatprep.subr.mxu0 0.0
    %1129 = vmatpush1.xpose.msra.mxu0 0.0
    %1130 = vmatprep.subr.mxu0 0.0
    %1131 = vmatpush1.xpose.msra.mxu0 0.0
    %1132 = vmatprep.subr.mxu0 0.0
    %1133 = vmatpush1.xpose.msra.mxu0 0.0
    %1134 = vmatprep.subr.mxu0 0.0
    %1135 = vmatpush1.xpose.msra.mxu0 0.0
    %1136 = vmatprep.subr.mxu0 0.0
    %1137 = vmatpush1.xpose.msra.mxu0 0.0
    %1138 = vmatprep.subr.mxu0 0.0
    %1139 = vmatpush1.xpose.msra.mxu0 0.0
    %1140 = vmatprep.subr.mxu0 0.0
    %1141 = vmatpush1.xpose.msra.mxu0 0.0
    %1142 = vmatprep.subr.mxu0 0.0
    %1143 = vmatpush1.xpose.msra.mxu0 0.0
    %1144 = vmatprep.subr.mxu0 0.0
    %1145 = vmatpush1.xpose.msra.mxu0 0.0
    %1146 = vmatprep.subr.mxu0 0.0
    %1147 = vmatpush1.xpose.msra.mxu0 0.0
    %1148 = vmatprep.subr.mxu0 0.0
    %1149 = vmatpush1.xpose.msra.mxu0 0.0
    %1150 = vmatprep.subr.mxu0 0.0
    %1151 = vmatpush1.xpose.msra.mxu0 0.0
    %1152 = vmatprep.subr.mxu0 0.0
    %1153 = vmatpush1.xpose.msra.mxu0 0.0
    %1154 = vmatprep.subr.mxu0 0.0
    %1155 = vmatpush1.xpose.msra.mxu0 0.0
    %1156 = vmatprep.subr.mxu0 0.0
    %1157 = vmatpush1.xpose.msra.mxu0 0.0
    %1158 = vmatprep.subr.mxu0 0.0
    %1159 = vmatpush1.xpose.msra.mxu0 0.0
    %1160 = vmatprep.subr.mxu0 0.0
    %1161 = vmatpush1.xpose.msra.mxu0 0.0
    %1162 = vmatprep.subr.mxu0 0.0
    %1163 = vmatpush1.xpose.msra.mxu0 0.0
    %1164 = vmatprep.subr.mxu0 0.0
    %1165 = vmatpush1.xpose.msra.mxu0 0.0
    %1166 = vmatprep.subr.mxu0 0.0
    %1167 = vmatpush1.xpose.msra.mxu0 0.0
    %1168 = vmatprep.subr.mxu0 0.0
    %1169 = vmatpush1.xpose.msra.mxu0 0.0
    %1170 = vmatprep.subr.mxu0 0.0
    %1171 = vmatpush1.xpose.msra.mxu0 0.0
    %1172 = vmatprep.subr.mxu0 0.0
    %1173 = vmatpush1.xpose.msra.mxu0 0.0
    %1174 = vmatprep.subr.mxu0 0.0
    %1175 = vmatpush1.xpose.msra.mxu0 0.0
    %1176 = vmatprep.subr.mxu0 0.0
    %1177 = vmatpush1.xpose.msra.mxu0 0.0
    %1178 = vmatprep.subr.mxu0 0.0
    %1179 = vmatpush1.xpose.msra.mxu0 0.0
    %1180 = vmatprep.subr.mxu0 0.0
    %1181 = vmatpush1.xpose.msra.mxu0 0.0
    %1182 = vmatprep.subr.mxu0 0.0
    %1183 = vmatpush1.xpose.msra.mxu0 0.0
    %1184 = vmatprep.subr.mxu0 0.0
    %1185 = vmatpush1.xpose.msra.mxu0 0.0
    %1186 = vmatprep.mubr.f32.mxu0 0.0
    %1187 = vmatmul.mubr.f32.gmra.mrb[0].mxu0 %v1118
    %v1188 = vpop.f32.mrb[0].mxu0
    %v1189 = vadd.f32 0.0, %v1188
    %v1190 = vpop.f32.mrb[0].mxu0
    %1191 = vdwg.mxu0
    %1193 = vrot.lane.b32.xlu0 %v649, 120
    %v1194 = vpop.permute.xlu0 %1193
    %v1195 = vsel %vm655, %v649, 0
    %v1197 = vsel %vm655, %v1194, 0
    %1199 = vmatprep.subr.mxu0 0.0
    %1200 = vmatpush1.xpose.msra.mxu0 %v1197
    %1201 = vmatprep.subr.mxu0 0.0
    %1202 = vmatpush1.xpose.msra.mxu0 0.0
    %1203 = vmatprep.subr.mxu0 0.0
    %1204 = vmatpush1.xpose.msra.mxu0 0.0
    %1205 = vmatprep.subr.mxu0 0.0
    %1206 = vmatpush1.xpose.msra.mxu0 0.0
    %1207 = vmatprep.subr.mxu0 0.0
    %1208 = vmatpush1.xpose.msra.mxu0 0.0
    %1209 = vmatprep.subr.mxu0 0.0
    %1210 = vmatpush1.xpose.msra.mxu0 0.0
    %1211 = vmatprep.subr.mxu0 0.0
    %1212 = vmatpush1.xpose.msra.mxu0 0.0
    %1213 = vmatprep.subr.mxu0 0.0
    %1214 = vmatpush1.xpose.msra.mxu0 0.0
    %1215 = vmatprep.subr.mxu0 0.0
    %1216 = vmatpush1.xpose.msra.mxu0 0.0
    %1217 = vmatprep.subr.mxu0 0.0
    %1218 = vmatpush1.xpose.msra.mxu0 0.0
    %1219 = vmatprep.subr.mxu0 0.0
    %1220 = vmatpush1.xpose.msra.mxu0 0.0
    %1221 = vmatprep.subr.mxu0 0.0
    %1222 = vmatpush1.xpose.msra.mxu0 0.0
    %1223 = vmatprep.subr.mxu0 0.0
    %1224 = vmatpush1.xpose.msra.mxu0 0.0
    %1225 = vmatprep.subr.mxu0 0.0
    %1226 = vmatpush1.xpose.msra.mxu0 0.0
    %1227 = vmatprep.subr.mxu0 0.0
    %1228 = vmatpush1.xpose.msra.mxu0 0.0
    %1229 = vmatprep.subr.mxu0 0.0
    %1230 = vmatpush1.xpose.msra.mxu0 0.0
    %1231 = vmatprep.subr.mxu0 0.0
    %1232 = vmatpush1.xpose.msra.mxu0 0.0
    %1233 = vmatprep.subr.mxu0 0.0
    %1234 = vmatpush1.xpose.msra.mxu0 0.0
    %1235 = vmatprep.subr.mxu0 0.0
    %1236 = vmatpush1.xpose.msra.mxu0 0.0
    %1237 = vmatprep.subr.mxu0 0.0
    %1238 = vmatpush1.xpose.msra.mxu0 0.0
    %1239 = vmatprep.subr.mxu0 0.0
    %1240 = vmatpush1.xpose.msra.mxu0 0.0
    %1241 = vmatprep.subr.mxu0 0.0
    %1242 = vmatpush1.xpose.msra.mxu0 0.0
    %1243 = vmatprep.subr.mxu0 0.0
    %1244 = vmatpush1.xpose.msra.mxu0 0.0
    %1245 = vmatprep.subr.mxu0 0.0
    %1246 = vmatpush1.xpose.msra.mxu0 0.0
    %1247 = vmatprep.subr.mxu0 0.0
    %1248 = vmatpush1.xpose.msra.mxu0 0.0
    %1249 = vmatprep.subr.mxu0 0.0
    %1250 = vmatpush1.xpose.msra.mxu0 0.0
    %1251 = vmatprep.subr.mxu0 0.0
    %1252 = vmatpush1.xpose.msra.mxu0 0.0
    %1253 = vmatprep.subr.mxu0 0.0
    %1254 = vmatpush1.xpose.msra.mxu0 0.0
    %1255 = vmatprep.subr.mxu0 0.0
    %1256 = vmatpush1.xpose.msra.mxu0 0.0
    %1257 = vmatprep.subr.mxu0 0.0
    %1258 = vmatpush1.xpose.msra.mxu0 0.0
    %1259 = vmatprep.subr.mxu0 0.0
    %1260 = vmatpush1.xpose.msra.mxu0 0.0
    %1261 = vmatprep.subr.mxu0 0.0
    %1262 = vmatpush1.xpose.msra.mxu0 0.0
    %1263 = vmatprep.mubr.f32.mxu0 0.0
    %1264 = vmatmul.mubr.f32.gmra.mrb[0].mxu0 %v1195
    %v1265 = vpop.f32.mrb[0].mxu0
    %v1266 = vadd.f32 0.0, %v1265
    %v1267 = vpop.f32.mrb[0].mxu0
    %1268 = vdwg.mxu0
    %v1269 = vlaneseq
    %v1270 = vshrl.u32 %v1269, 7
    %v1271 = vlaneseq
    %v1272 = vand.u32 %v1271, 127
    %vm1273 = vcmp.le.s32.totalorder %v1272, %v1270
    %v1274 = vsel %vm1273, %v727, -1e+30
    %v1275 = vsel %vm1273, %v804, -1e+30
    %v1276 = vsel %vm1273, %v881, -1e+30
    %v1277 = vsel %vm1273, %v958, -1e+30
    %v1278 = vsel %vm1273, %v1035, -1e+30
    %v1279 = vsel %vm1273, %v1112, -1e+30
    %v1280 = vsel %vm1273, %v1189, -1e+30
    %v1281 = vsel %vm1273, %v1266, -1e+30
    %v1282 = vsel %vm655, %v1274, -inf
    %1283 = vmax.xlane.f32.xlu0 %v1282
    %v1284 = vpop.xlane.xlu0 %1283
    %v1285 = vsel %vm655, %v1275, -inf
    %1286 = vmax.xlane.f32.xlu0 %v1285
    %v1287 = vpop.xlane.xlu0 %1286
    %v1288 = vsel %vm655, %v1276, -inf
    %1289 = vmax.xlane.f32.xlu0 %v1288
    %v1290 = vpop.xlane.xlu0 %1289
    %v1291 = vsel %vm655, %v1277, -inf
    %1292 = vmax.xlane.f32.xlu0 %v1291
    %v1293 = vpop.xlane.xlu0 %1292
    %v1294 = vsel %vm655, %v1278, -inf
    %1295 = vmax.xlane.f32.xlu0 %v1294
    %v1296 = vpop.xlane.xlu0 %1295
    %v1297 = vsel %vm655, %v1279, -inf
    %1298 = vmax.xlane.f32.xlu0 %v1297
    %v1299 = vpop.xlane.xlu0 %1298
    %v1300 = vsel %vm655, %v1280, -inf
    %1301 = vmax.xlane.f32.xlu0 %v1300
    %v1302 = vpop.xlane.xlu0 %1301
    %v1303 = vsel %vm655, %v1281, -inf
    %1304 = vmax.xlane.f32.xlu0 %v1303
    %v1305 = vpop.xlane.xlu0 %1304
    %v1306 = vsub.f32 %v1274, %v1284
    %v1307 = vsub.f32 %v1275, %v1287
    %v1308 = vsub.f32 %v1276, %v1290
    %v1309 = vsub.f32 %v1277, %v1293
    %v1310 = vsub.f32 %v1278, %v1296
    %v1311 = vsub.f32 %v1279, %v1299
    %v1312 = vsub.f32 %v1280, %v1302
    %v1313 = vsub.f32 %v1281, %v1305
    %v1314 = vmul.f32 %v1306, 1.442695
    %v1315 = vpow.pop %v1314
    %v1316 = vmul.f32 %v1307, 1.442695
    %v1317 = vpow.pop %v1316
    %v1318 = vmul.f32 %v1308, 1.442695
    %v1319 = vpow.pop %v1318
    %v1320 = vmul.f32 %v1309, 1.442695
    %v1321 = vpow.pop %v1320
    %v1322 = vmul.f32 %v1310, 1.442695
    %v1323 = vpow.pop %v1322
    %v1324 = vmul.f32 %v1311, 1.442695
    %v1325 = vpow.pop %v1324
    %v1326 = vmul.f32 %v1312, 1.442695
    %v1327 = vpow.pop %v1326
    %v1328 = vmul.f32 %v1313, 1.442695
    %v1329 = vpow.pop %v1328
    %v1330 = vsel %vm655, %v1315, 0.0
    %1331 = vadd.xlane.f32.xlu0 %v1330
    %v1332 = vpop.xlane.xlu0 %1331
    %v1333 = vsel %vm655, %v1317, 0.0
    %1334 = vadd.xlane.f32.xlu0 %v1333
    %v1335 = vpop.xlane.xlu0 %1334
    %v1336 = vsel %vm655, %v1319, 0.0
    %1337 = vadd.xlane.f32.xlu0 %v1336
    %v1338 = vpop.xlane.xlu0 %1337
    %v1339 = vsel %vm655, %v1321, 0.0
    %1340 = vadd.xlane.f32.xlu0 %v1339
    %v1341 = vpop.xlane.xlu0 %1340
    %v1342 = vsel %vm655, %v1323, 0.0
    %1343 = vadd.xlane.f32.xlu0 %v1342
    %v1344 = vpop.xlane.xlu0 %1343
    %v1345 = vsel %vm655, %v1325, 0.0
    %1346 = vadd.xlane.f32.xlu0 %v1345
    %v1347 = vpop.xlane.xlu0 %1346
    %v1348 = vsel %vm655, %v1327, 0.0
    %1349 = vadd.xlane.f32.xlu0 %v1348
    %v1350 = vpop.xlane.xlu0 %1349
    %v1351 = vsel %vm655, %v1329, 0.0
    %1352 = vadd.xlane.f32.xlu0 %v1351
    %v1353 = vpop.xlane.xlu0 %1352
    %v1354 = vrcp.pop %v1332
    %v1355 = vrcp.pop %v1335
    %v1356 = vrcp.pop %v1338
    %v1357 = vrcp.pop %v1341
    %v1358 = vrcp.pop %v1344
    %v1359 = vrcp.pop %v1347
    %v1360 = vrcp.pop %v1350
    %v1361 = vrcp.pop %v1353
    %v1362 = vmul.f32 %v1332, %v1354
    %v1363 = vmul.f32 %v1335, %v1355
    %v1364 = vmul.f32 %v1338, %v1356
    %v1365 = vmul.f32 %v1341, %v1357
    %v1366 = vmul.f32 %v1344, %v1358
    %v1367 = vmul.f32 %v1347, %v1359
    %v1368 = vmul.f32 %v1350, %v1360
    %v1369 = vmul.f32 %v1353, %v1361
    %v1370 = vsub.f32 2.0, %v1362
    %v1371 = vsub.f32 2.0, %v1363
    %v1372 = vsub.f32 2.0, %v1364
    %v1373 = vsub.f32 2.0, %v1365
    %v1374 = vsub.f32 2.0, %v1366
    %v1375 = vsub.f32 2.0, %v1367
    %v1376 = vsub.f32 2.0, %v1368
    %v1377 = vsub.f32 2.0, %v1369
    %v1378 = vmul.f32 %v1354, %v1370
    %v1379 = vmul.f32 %v1355, %v1371
    %v1380 = vmul.f32 %v1356, %v1372
    %v1381 = vmul.f32 %v1357, %v1373
    %v1382 = vmul.f32 %v1358, %v1374
    %v1383 = vmul.f32 %v1359, %v1375
    %v1384 = vmul.f32 %v1360, %v1376
    %v1385 = vmul.f32 %v1361, %v1377
    %v1386 = vmul.f32 %v1315, %v1378
    %v1387 = vmul.f32 %v1317, %v1379
    %v1388 = vmul.f32 %v1319, %v1380
    %v1389 = vmul.f32 %v1321, %v1381
    %v1390 = vmul.f32 %v1323, %v1382
    %v1391 = vmul.f32 %v1325, %v1383
    %v1392 = vmul.f32 %v1327, %v1384
    %v1393 = vmul.f32 %v1329, %v1385
    %1394 = vrot.lane.b32.xlu0 %v156, 112
    %v1395 = vpop.permute.xlu0 %1394
    %v1398 = vsel %vm655, %v1386, 0
    %1400 = vmatprep.subr.mxu0 0.0
    %1401 = vmatpush1.msra.mxu0 %v1395
    %1402 = vmatprep.subr.mxu0 0.0
    %1403 = vmatpush1.msra.mxu0 0.0
    %1404 = vmatprep.subr.mxu0 0.0
    %1405 = vmatpush1.msra.mxu0 0.0
    %1406 = vmatprep.subr.mxu0 0.0
    %1407 = vmatpush1.msra.mxu0 0.0
    %1408 = vmatprep.subr.mxu0 0.0
    %1409 = vmatpush1.msra.mxu0 0.0
    %1410 = vmatprep.subr.mxu0 0.0
    %1411 = vmatpush1.msra.mxu0 0.0
    %1412 = vmatprep.subr.mxu0 0.0
    %1413 = vmatpush1.msra.mxu0 0.0
    %1414 = vmatprep.subr.mxu0 0.0
    %1415 = vmatpush1.msra.mxu0 0.0
    %1416 = vmatprep.subr.mxu0 0.0
    %1417 = vmatpush1.msra.mxu0 0.0
    %1418 = vmatprep.subr.mxu0 0.0
    %1419 = vmatpush1.msra.mxu0 0.0
    %1420 = vmatprep.subr.mxu0 0.0
    %1421 = vmatpush1.msra.mxu0 0.0
    %1422 = vmatprep.subr.mxu0 0.0
    %1423 = vmatpush1.msra.mxu0 0.0
    %1424 = vmatprep.subr.mxu0 0.0
    %1425 = vmatpush1.msra.mxu0 0.0
    %1426 = vmatprep.subr.mxu0 0.0
    %1427 = vmatpush1.msra.mxu0 0.0
    %1428 = vmatprep.subr.mxu0 0.0
    %1429 = vmatpush1.msra.mxu0 0.0
    %1430 = vmatprep.subr.mxu0 0.0
    %1431 = vmatpush1.msra.mxu0 0.0
    %1432 = vmatprep.subr.mxu0 0.0
    %1433 = vmatpush1.msra.mxu0 0.0
    %1434 = vmatprep.subr.mxu0 0.0
    %1435 = vmatpush1.msra.mxu0 0.0
    %1436 = vmatprep.subr.mxu0 0.0
    %1437 = vmatpush1.msra.mxu0 0.0
    %1438 = vmatprep.subr.mxu0 0.0
    %1439 = vmatpush1.msra.mxu0 0.0
    %1440 = vmatprep.subr.mxu0 0.0
    %1441 = vmatpush1.msra.mxu0 0.0
    %1442 = vmatprep.subr.mxu0 0.0
    %1443 = vmatpush1.msra.mxu0 0.0
    %1444 = vmatprep.subr.mxu0 0.0
    %1445 = vmatpush1.msra.mxu0 0.0
    %1446 = vmatprep.subr.mxu0 0.0
    %1447 = vmatpush1.msra.mxu0 0.0
    %1448 = vmatprep.subr.mxu0 0.0
    %1449 = vmatpush1.msra.mxu0 0.0
    %1450 = vmatprep.subr.mxu0 0.0
    %1451 = vmatpush1.msra.mxu0 0.0
    %1452 = vmatprep.subr.mxu0 0.0
    %1453 = vmatpush1.msra.mxu0 0.0
    %1454 = vmatprep.subr.mxu0 0.0
    %1455 = vmatpush1.msra.mxu0 0.0
    %1456 = vmatprep.subr.mxu0 0.0
    %1457 = vmatpush1.msra.mxu0 0.0
    %1458 = vmatprep.subr.mxu0 0.0
    %1459 = vmatpush1.msra.mxu0 0.0
    %1460 = vmatprep.subr.mxu0 0.0
    %1461 = vmatpush1.msra.mxu0 0.0
    %1462 = vmatprep.subr.mxu0 0.0
    %1463 = vmatpush1.msra.mxu0 0.0
    %1464 = vmatprep.mubr.f32.mxu0 0.0
    %1465 = vmatmul.mubr.f32.gmra.mrb[0].mxu0 %v1398
    %v1466 = vpop.f32.mrb[0].mxu0
    %v1467 = vadd.f32 0.0, %v1466
    %v1468 = vpop.f32.mrb[0].mxu0
    %1469 = vdwg.mxu0
    %1470 = vrot.lane.b32.xlu0 %v226, 112
    %v1471 = vpop.permute.xlu0 %1470
    %v1474 = vsel %vm655, %v1387, 0
    %1476 = vmatprep.subr.mxu0 0.0
    %1477 = vmatpush1.msra.mxu0 %v1471
    %1478 = vmatprep.subr.mxu0 0.0
    %1479 = vmatpush1.msra.mxu0 0.0
    %1480 = vmatprep.subr.mxu0 0.0
    %1481 = vmatpush1.msra.mxu0 0.0
    %1482 = vmatprep.subr.mxu0 0.0
    %1483 = vmatpush1.msra.mxu0 0.0
    %1484 = vmatprep.subr.mxu0 0.0
    %1485 = vmatpush1.msra.mxu0 0.0
    %1486 = vmatprep.subr.mxu0 0.0
    %1487 = vmatpush1.msra.mxu0 0.0
    %1488 = vmatprep.subr.mxu0 0.0
    %1489 = vmatpush1.msra.mxu0 0.0
    %1490 = vmatprep.subr.mxu0 0.0
    %1491 = vmatpush1.msra.mxu0 0.0
    %1492 = vmatprep.subr.mxu0 0.0
    %1493 = vmatpush1.msra.mxu0 0.0
    %1494 = vmatprep.subr.mxu0 0.0
    %1495 = vmatpush1.msra.mxu0 0.0
    %1496 = vmatprep.subr.mxu0 0.0
    %1497 = vmatpush1.msra.mxu0 0.0
    %1498 = vmatprep.subr.mxu0 0.0
    %1499 = vmatpush1.msra.mxu0 0.0
    %1500 = vmatprep.subr.mxu0 0.0
    %1501 = vmatpush1.msra.mxu0 0.0
    %1502 = vmatprep.subr.mxu0 0.0
    %1503 = vmatpush1.msra.mxu0 0.0
    %1504 = vmatprep.subr.mxu0 0.0
    %1505 = vmatpush1.msra.mxu0 0.0
    %1506 = vmatprep.subr.mxu0 0.0
    %1507 = vmatpush1.msra.mxu0 0.0
    %1508 = vmatprep.subr.mxu0 0.0
    %1509 = vmatpush1.msra.mxu0 0.0
    %1510 = vmatprep.subr.mxu0 0.0
    %1511 = vmatpush1.msra.mxu0 0.0
    %1512 = vmatprep.subr.mxu0 0.0
    %1513 = vmatpush1.msra.mxu0 0.0
    %1514 = vmatprep.subr.mxu0 0.0
    %1515 = vmatpush1.msra.mxu0 0.0
    %1516 = vmatprep.subr.mxu0 0.0
    %1517 = vmatpush1.msra.mxu0 0.0
    %1518 = vmatprep.subr.mxu0 0.0
    %1519 = vmatpush1.msra.mxu0 0.0
    %1520 = vmatprep.subr.mxu0 0.0
    %1521 = vmatpush1.msra.mxu0 0.0
    %1522 = vmatprep.subr.mxu0 0.0
    %1523 = vmatpush1.msra.mxu0 0.0
    %1524 = vmatprep.subr.mxu0 0.0
    %1525 = vmatpush1.msra.mxu0 0.0
    %1526 = vmatprep.subr.mxu0 0.0
    %1527 = vmatpush1.msra.mxu0 0.0
    %1528 = vmatprep.subr.mxu0 0.0
    %1529 = vmatpush1.msra.mxu0 0.0
    %1530 = vmatprep.subr.mxu0 0.0
    %1531 = vmatpush1.msra.mxu0 0.0
    %1532 = vmatprep.subr.mxu0 0.0
    %1533 = vmatpush1.msra.mxu0 0.0
    %1534 = vmatprep.subr.mxu0 0.0
    %1535 = vmatpush1.msra.mxu0 0.0
    %1536 = vmatprep.subr.mxu0 0.0
    %1537 = vmatpush1.msra.mxu0 0.0
    %1538 = vmatprep.subr.mxu0 0.0
    %1539 = vmatpush1.msra.mxu0 0.0
    %1540 = vmatprep.mubr.f32.mxu0 0.0
    %1541 = vmatmul.mubr.f32.gmra.mrb[0].mxu0 %v1474
    %v1542 = vpop.f32.mrb[0].mxu0
    %v1543 = vadd.f32 0.0, %v1542
    %v1544 = vpop.f32.mrb[0].mxu0
    %1545 = vdwg.mxu0
    %1546 = vrot.lane.b32.xlu0 %v296, 112
    %v1547 = vpop.permute.xlu0 %1546
    %v1550 = vsel %vm655, %v1388, 0
    %1552 = vmatprep.subr.mxu0 0.0
    %1553 = vmatpush1.msra.mxu0 %v1547
    %1554 = vmatprep.subr.mxu0 0.0
    %1555 = vmatpush1.msra.mxu0 0.0
    %1556 = vmatprep.subr.mxu0 0.0
    %1557 = vmatpush1.msra.mxu0 0.0
    %1558 = vmatprep.subr.mxu0 0.0
    %1559 = vmatpush1.msra.mxu0 0.0
    %1560 = vmatprep.subr.mxu0 0.0
    %1561 = vmatpush1.msra.mxu0 0.0
    %1562 = vmatprep.subr.mxu0 0.0
    %1563 = vmatpush1.msra.mxu0 0.0
    %1564 = vmatprep.subr.mxu0 0.0
    %1565 = vmatpush1.msra.mxu0 0.0
    %1566 = vmatprep.subr.mxu0 0.0
    %1567 = vmatpush1.msra.mxu0 0.0
    %1568 = vmatprep.subr.mxu0 0.0
    %1569 = vmatpush1.msra.mxu0 0.0
    %1570 = vmatprep.subr.mxu0 0.0
    %1571 = vmatpush1.msra.mxu0 0.0
    %1572 = vmatprep.subr.mxu0 0.0
    %1573 = vmatpush1.msra.mxu0 0.0
    %1574 = vmatprep.subr.mxu0 0.0
    %1575 = vmatpush1.msra.mxu0 0.0
    %1576 = vmatprep.subr.mxu0 0.0
    %1577 = vmatpush1.msra.mxu0 0.0
    %1578 = vmatprep.subr.mxu0 0.0
    %1579 = vmatpush1.msra.mxu0 0.0
    %1580 = vmatprep.subr.mxu0 0.0
    %1581 = vmatpush1.msra.mxu0 0.0
    %1582 = vmatprep.subr.mxu0 0.0
    %1583 = vmatpush1.msra.mxu0 0.0
    %1584 = vmatprep.subr.mxu0 0.0
    %1585 = vmatpush1.msra.mxu0 0.0
    %1586 = vmatprep.subr.mxu0 0.0
    %1587 = vmatpush1.msra.mxu0 0.0
    %1588 = vmatprep.subr.mxu0 0.0
    %1589 = vmatpush1.msra.mxu0 0.0
    %1590 = vmatprep.subr.mxu0 0.0
    %1591 = vmatpush1.msra.mxu0 0.0
    %1592 = vmatprep.subr.mxu0 0.0
    %1593 = vmatpush1.msra.mxu0 0.0
    %1594 = vmatprep.subr.mxu0 0.0
    %1595 = vmatpush1.msra.mxu0 0.0
    %1596 = vmatprep.subr.mxu0 0.0
    %1597 = vmatpush1.msra.mxu0 0.0
    %1598 = vmatprep.subr.mxu0 0.0
    %1599 = vmatpush1.msra.mxu0 0.0
    %1600 = vmatprep.subr.mxu0 0.0
    %1601 = vmatpush1.msra.mxu0 0.0
    %1602 = vmatprep.subr.mxu0 0.0
    %1603 = vmatpush1.msra.mxu0 0.0
    %1604 = vmatprep.subr.mxu0 0.0
    %1605 = vmatpush1.msra.mxu0 0.0
    %1606 = vmatprep.subr.mxu0 0.0
    %1607 = vmatpush1.msra.mxu0 0.0
    %1608 = vmatprep.subr.mxu0 0.0
    %1609 = vmatpush1.msra.mxu0 0.0
    %1610 = vmatprep.subr.mxu0 0.0
    %1611 = vmatpush1.msra.mxu0 0.0
    %1612 = vmatprep.subr.mxu0 0.0
    %1613 = vmatpush1.msra.mxu0 0.0
    %1614 = vmatprep.subr.mxu0 0.0
    %1615 = vmatpush1.msra.mxu0 0.0
    %1616 = vmatprep.mubr.f32.mxu0 0.0
    %1617 = vmatmul.mubr.f32.gmra.mrb[0].mxu0 %v1550
    %v1618 = vpop.f32.mrb[0].mxu0
    %v1619 = vadd.f32 0.0, %v1618
    %v1620 = vpop.f32.mrb[0].mxu0
    %1621 = vdwg.mxu0
    %1622 = vrot.lane.b32.xlu0 %v366, 112
    %v1623 = vpop.permute.xlu0 %1622
    %v1626 = vsel %vm655, %v1389, 0
    %1628 = vmatprep.subr.mxu0 0.0
    %1629 = vmatpush1.msra.mxu0 %v1623
    %1630 = vmatprep.subr.mxu0 0.0
    %1631 = vmatpush1.msra.mxu0 0.0
    %1632 = vmatprep.subr.mxu0 0.0
    %1633 = vmatpush1.msra.mxu0 0.0
    %1634 = vmatprep.subr.mxu0 0.0
    %1635 = vmatpush1.msra.mxu0 0.0
    %1636 = vmatprep.subr.mxu0 0.0
    %1637 = vmatpush1.msra.mxu0 0.0
    %1638 = vmatprep.subr.mxu0 0.0
    %1639 = vmatpush1.msra.mxu0 0.0
    %1640 = vmatprep.subr.mxu0 0.0
    %1641 = vmatpush1.msra.mxu0 0.0
    %1642 = vmatprep.subr.mxu0 0.0
    %1643 = vmatpush1.msra.mxu0 0.0
    %1644 = vmatprep.subr.mxu0 0.0
    %1645 = vmatpush1.msra.mxu0 0.0
    %1646 = vmatprep.subr.mxu0 0.0
    %1647 = vmatpush1.msra.mxu0 0.0
    %1648 = vmatprep.subr.mxu0 0.0
    %1649 = vmatpush1.msra.mxu0 0.0
    %1650 = vmatprep.subr.mxu0 0.0
    %1651 = vmatpush1.msra.mxu0 0.0
    %1652 = vmatprep.subr.mxu0 0.0
    %1653 = vmatpush1.msra.mxu0 0.0
    %1654 = vmatprep.subr.mxu0 0.0
    %1655 = vmatpush1.msra.mxu0 0.0
    %1656 = vmatprep.subr.mxu0 0.0
    %1657 = vmatpush1.msra.mxu0 0.0
    %1658 = vmatprep.subr.mxu0 0.0
    %1659 = vmatpush1.msra.mxu0 0.0
    %1660 = vmatprep.subr.mxu0 0.0
    %1661 = vmatpush1.msra.mxu0 0.0
    %1662 = vmatprep.subr.mxu0 0.0
    %1663 = vmatpush1.msra.mxu0 0.0
    %1664 = vmatprep.subr.mxu0 0.0
    %1665 = vmatpush1.msra.mxu0 0.0
    %1666 = vmatprep.subr.mxu0 0.0
    %1667 = vmatpush1.msra.mxu0 0.0
    %1668 = vmatprep.subr.mxu0 0.0
    %1669 = vmatpush1.msra.mxu0 0.0
    %1670 = vmatprep.subr.mxu0 0.0
    %1671 = vmatpush1.msra.mxu0 0.0
    %1672 = vmatprep.subr.mxu0 0.0
    %1673 = vmatpush1.msra.mxu0 0.0
    %1674 = vmatprep.subr.mxu0 0.0
    %1675 = vmatpush1.msra.mxu0 0.0
    %1676 = vmatprep.subr.mxu0 0.0
    %1677 = vmatpush1.msra.mxu0 0.0
    %1678 = vmatprep.subr.mxu0 0.0
    %1679 = vmatpush1.msra.mxu0 0.0
    %1680 = vmatprep.subr.mxu0 0.0
    %1681 = vmatpush1.msra.mxu0 0.0
    %1682 = vmatprep.subr.mxu0 0.0
    %1683 = vmatpush1.msra.mxu0 0.0
    %1684 = vmatprep.subr.mxu0 0.0
    %1685 = vmatpush1.msra.mxu0 0.0
    %1686 = vmatprep.subr.mxu0 0.0
    %1687 = vmatpush1.msra.mxu0 0.0
    %1688 = vmatprep.subr.mxu0 0.0
    %1689 = vmatpush1.msra.mxu0 0.0
    %1690 = vmatprep.subr.mxu0 0.0
    %1691 = vmatpush1.msra.mxu0 0.0
    %1692 = vmatprep.mubr.f32.mxu0 0.0
    %1693 = vmatmul.mubr.f32.gmra.mrb[0].mxu0 %v1626
    %v1694 = vpop.f32.mrb[0].mxu0
    %v1695 = vadd.f32 0.0, %v1694
    %v1696 = vpop.f32.mrb[0].mxu0
    %1697 = vdwg.mxu0
    %1698 = vrot.lane.b32.xlu0 %v439, 112
    %v1699 = vpop.permute.xlu0 %1698
    %v1702 = vsel %vm655, %v1390, 0
    %1704 = vmatprep.subr.mxu0 0.0
    %1705 = vmatpush1.msra.mxu0 %v1699
    %1706 = vmatprep.subr.mxu0 0.0
    %1707 = vmatpush1.msra.mxu0 0.0
    %1708 = vmatprep.subr.mxu0 0.0
    %1709 = vmatpush1.msra.mxu0 0.0
    %1710 = vmatprep.subr.mxu0 0.0
    %1711 = vmatpush1.msra.mxu0 0.0
    %1712 = vmatprep.subr.mxu0 0.0
    %1713 = vmatpush1.msra.mxu0 0.0
    %1714 = vmatprep.subr.mxu0 0.0
    %1715 = vmatpush1.msra.mxu0 0.0
    %1716 = vmatprep.subr.mxu0 0.0
    %1717 = vmatpush1.msra.mxu0 0.0
    %1718 = vmatprep.subr.mxu0 0.0
    %1719 = vmatpush1.msra.mxu0 0.0
    %1720 = vmatprep.subr.mxu0 0.0
    %1721 = vmatpush1.msra.mxu0 0.0
    %1722 = vmatprep.subr.mxu0 0.0
    %1723 = vmatpush1.msra.mxu0 0.0
    %1724 = vmatprep.subr.mxu0 0.0
    %1725 = vmatpush1.msra.mxu0 0.0
    %1726 = vmatprep.subr.mxu0 0.0
    %1727 = vmatpush1.msra.mxu0 0.0
    %1728 = vmatprep.subr.mxu0 0.0
    %1729 = vmatpush1.msra.mxu0 0.0
    %1730 = vmatprep.subr.mxu0 0.0
    %1731 = vmatpush1.msra.mxu0 0.0
    %1732 = vmatprep.subr.mxu0 0.0
    %1733 = vmatpush1.msra.mxu0 0.0
    %1734 = vmatprep.subr.mxu0 0.0
    %1735 = vmatpush1.msra.mxu0 0.0
    %1736 = vmatprep.subr.mxu0 0.0
    %1737 = vmatpush1.msra.mxu0 0.0
    %1738 = vmatprep.subr.mxu0 0.0
    %1739 = vmatpush1.msra.mxu0 0.0
    %1740 = vmatprep.subr.mxu0 0.0
    %1741 = vmatpush1.msra.mxu0 0.0
    %1742 = vmatprep.subr.mxu0 0.0
    %1743 = vmatpush1.msra.mxu0 0.0
    %1744 = vmatprep.subr.mxu0 0.0
    %1745 = vmatpush1.msra.mxu0 0.0
    %1746 = vmatprep.subr.mxu0 0.0
    %1747 = vmatpush1.msra.mxu0 0.0
    %1748 = vmatprep.subr.mxu0 0.0
    %1749 = vmatpush1.msra.mxu0 0.0
    %1750 = vmatprep.subr.mxu0 0.0
    %1751 = vmatpush1.msra.mxu0 0.0
    %1752 = vmatprep.subr.mxu0 0.0
    %1753 = vmatpush1.msra.mxu0 0.0
    %1754 = vmatprep.subr.mxu0 0.0
    %1755 = vmatpush1.msra.mxu0 0.0
    %1756 = vmatprep.subr.mxu0 0.0
    %1757 = vmatpush1.msra.mxu0 0.0
    %1758 = vmatprep.subr.mxu0 0.0
    %1759 = vmatpush1.msra.mxu0 0.0
    %1760 = vmatprep.subr.mxu0 0.0
    %1761 = vmatpush1.msra.mxu0 0.0
    %1762 = vmatprep.subr.mxu0 0.0
    %1763 = vmatpush1.msra.mxu0 0.0
    %1764 = vmatprep.subr.mxu0 0.0
    %1765 = vmatpush1.msra.mxu0 0.0
    %1766 = vmatprep.subr.mxu0 0.0
    %1767 = vmatpush1.msra.mxu0 0.0
    %1768 = vmatprep.mubr.f32.mxu0 0.0
    %1769 = vmatmul.mubr.f32.gmra.mrb[0].mxu0 %v1702
    %v1770 = vpop.f32.mrb[0].mxu0
    %v1771 = vadd.f32 0.0, %v1770
    %v1772 = vpop.f32.mrb[0].mxu0
    %1773 = vdwg.mxu0
    %1774 = vrot.lane.b32.xlu0 %v509, 112
    %v1775 = vpop.permute.xlu0 %1774
    %v1778 = vsel %vm655, %v1391, 0
    %1780 = vmatprep.subr.mxu0 0.0
    %1781 = vmatpush1.msra.mxu0 %v1775
    %1782 = vmatprep.subr.mxu0 0.0
    %1783 = vmatpush1.msra.mxu0 0.0
    %1784 = vmatprep.subr.mxu0 0.0
    %1785 = vmatpush1.msra.mxu0 0.0
    %1786 = vmatprep.subr.mxu0 0.0
    %1787 = vmatpush1.msra.mxu0 0.0
    %1788 = vmatprep.subr.mxu0 0.0
    %1789 = vmatpush1.msra.mxu0 0.0
    %1790 = vmatprep.subr.mxu0 0.0
    %1791 = vmatpush1.msra.mxu0 0.0
    %1792 = vmatprep.subr.mxu0 0.0
    %1793 = vmatpush1.msra.mxu0 0.0
    %1794 = vmatprep.subr.mxu0 0.0
    %1795 = vmatpush1.msra.mxu0 0.0
    %1796 = vmatprep.subr.mxu0 0.0
    %1797 = vmatpush1.msra.mxu0 0.0
    %1798 = vmatprep.subr.mxu0 0.0
    %1799 = vmatpush1.msra.mxu0 0.0
    %1800 = vmatprep.subr.mxu0 0.0
    %1801 = vmatpush1.msra.mxu0 0.0
    %1802 = vmatprep.subr.mxu0 0.0
    %1803 = vmatpush1.msra.mxu0 0.0
    %1804 = vmatprep.subr.mxu0 0.0
    %1805 = vmatpush1.msra.mxu0 0.0
    %1806 = vmatprep.subr.mxu0 0.0
    %1807 = vmatpush1.msra.mxu0 0.0
    %1808 = vmatprep.subr.mxu0 0.0
    %1809 = vmatpush1.msra.mxu0 0.0
    %1810 = vmatprep.subr.mxu0 0.0
    %1811 = vmatpush1.msra.mxu0 0.0
    %1812 = vmatprep.subr.mxu0 0.0
    %1813 = vmatpush1.msra.mxu0 0.0
    %1814 = vmatprep.subr.mxu0 0.0
    %1815 = vmatpush1.msra.mxu0 0.0
    %1816 = vmatprep.subr.mxu0 0.0
    %1817 = vmatpush1.msra.mxu0 0.0
    %1818 = vmatprep.subr.mxu0 0.0
    %1819 = vmatpush1.msra.mxu0 0.0
    %1820 = vmatprep.subr.mxu0 0.0
    %1821 = vmatpush1.msra.mxu0 0.0
    %1822 = vmatprep.subr.mxu0 0.0
    %1823 = vmatpush1.msra.mxu0 0.0
    %1824 = vmatprep.subr.mxu0 0.0
    %1825 = vmatpush1.msra.mxu0 0.0
    %1826 = vmatprep.subr.mxu0 0.0
    %1827 = vmatpush1.msra.mxu0 0.0
    %1828 = vmatprep.subr.mxu0 0.0
    %1829 = vmatpush1.msra.mxu0 0.0
    %1830 = vmatprep.subr.mxu0 0.0
    %1831 = vmatpush1.msra.mxu0 0.0
    %1832 = vmatprep.subr.mxu0 0.0
    %1833 = vmatpush1.msra.mxu0 0.0
    %1834 = vmatprep.subr.mxu0 0.0
    %1835 = vmatpush1.msra.mxu0 0.0
    %1836 = vmatprep.subr.mxu0 0.0
    %1837 = vmatpush1.msra.mxu0 0.0
    %1838 = vmatprep.subr.mxu0 0.0
    %1839 = vmatpush1.msra.mxu0 0.0
    %1840 = vmatprep.subr.mxu0 0.0
    %1841 = vmatpush1.msra.mxu0 0.0
    %1842 = vmatprep.subr.mxu0 0.0
    %1843 = vmatpush1.msra.mxu0 0.0
    %1844 = vmatprep.mubr.f32.mxu0 0.0
    %1845 = vmatmul.mubr.f32.gmra.mrb[0].mxu0 %v1778
    %v1846 = vpop.f32.mrb[0].mxu0
    %v1847 = vadd.f32 0.0, %v1846
    %v1848 = vpop.f32.mrb[0].mxu0
    %1849 = vdwg.mxu0
    %1850 = vrot.lane.b32.xlu0 %v579, 112
    %v1851 = vpop.permute.xlu0 %1850
    %v1854 = vsel %vm655, %v1392, 0
    %1856 = vmatprep.subr.mxu0 0.0
    %1857 = vmatpush1.msra.mxu0 %v1851
    %1858 = vmatprep.subr.mxu0 0.0
    %1859 = vmatpush1.msra.mxu0 0.0
    %1860 = vmatprep.subr.mxu0 0.0
    %1861 = vmatpush1.msra.mxu0 0.0
    %1862 = vmatprep.subr.mxu0 0.0
    %1863 = vmatpush1.msra.mxu0 0.0
    %1864 = vmatprep.subr.mxu0 0.0
    %1865 = vmatpush1.msra.mxu0 0.0
    %1866 = vmatprep.subr.mxu0 0.0
    %1867 = vmatpush1.msra.mxu0 0.0
    %1868 = vmatprep.subr.mxu0 0.0
    %1869 = vmatpush1.msra.mxu0 0.0
    %1870 = vmatprep.subr.mxu0 0.0
    %1871 = vmatpush1.msra.mxu0 0.0
    %1872 = vmatprep.subr.mxu0 0.0
    %1873 = vmatpush1.msra.mxu0 0.0
    %1874 = vmatprep.subr.mxu0 0.0
    %1875 = vmatpush1.msra.mxu0 0.0
    %1876 = vmatprep.subr.mxu0 0.0
    %1877 = vmatpush1.msra.mxu0 0.0
    %1878 = vmatprep.subr.mxu0 0.0
    %1879 = vmatpush1.msra.mxu0 0.0
    %1880 = vmatprep.subr.mxu0 0.0
    %1881 = vmatpush1.msra.mxu0 0.0
    %1882 = vmatprep.subr.mxu0 0.0
    %1883 = vmatpush1.msra.mxu0 0.0
    %1884 = vmatprep.subr.mxu0 0.0
    %1885 = vmatpush1.msra.mxu0 0.0
    %1886 = vmatprep.subr.mxu0 0.0
    %1887 = vmatpush1.msra.mxu0 0.0
    %1888 = vmatprep.subr.mxu0 0.0
    %1889 = vmatpush1.msra.mxu0 0.0
    %1890 = vmatprep.subr.mxu0 0.0
    %1891 = vmatpush1.msra.mxu0 0.0
    %1892 = vmatprep.subr.mxu0 0.0
    %1893 = vmatpush1.msra.mxu0 0.0
    %1894 = vmatprep.subr.mxu0 0.0
    %1895 = vmatpush1.msra.mxu0 0.0
    %1896 = vmatprep.subr.mxu0 0.0
    %1897 = vmatpush1.msra.mxu0 0.0
    %1898 = vmatprep.subr.mxu0 0.0
    %1899 = vmatpush1.msra.mxu0 0.0
    %1900 = vmatprep.subr.mxu0 0.0
    %1901 = vmatpush1.msra.mxu0 0.0
    %1902 = vmatprep.subr.mxu0 0.0
    %1903 = vmatpush1.msra.mxu0 0.0
    %1904 = vmatprep.subr.mxu0 0.0
    %1905 = vmatpush1.msra.mxu0 0.0
    %1906 = vmatprep.subr.mxu0 0.0
    %1907 = vmatpush1.msra.mxu0 0.0
    %1908 = vmatprep.subr.mxu0 0.0
    %1909 = vmatpush1.msra.mxu0 0.0
    %1910 = vmatprep.subr.mxu0 0.0
    %1911 = vmatpush1.msra.mxu0 0.0
    %1912 = vmatprep.subr.mxu0 0.0
    %1913 = vmatpush1.msra.mxu0 0.0
    %1914 = vmatprep.subr.mxu0 0.0
    %1915 = vmatpush1.msra.mxu0 0.0
    %1916 = vmatprep.subr.mxu0 0.0
    %1917 = vmatpush1.msra.mxu0 0.0
    %1918 = vmatprep.subr.mxu0 0.0
    %1919 = vmatpush1.msra.mxu0 0.0
    %1920 = vmatprep.mubr.f32.mxu0 0.0
    %1921 = vmatmul.mubr.f32.gmra.mrb[0].mxu0 %v1854
    %v1922 = vpop.f32.mrb[0].mxu0
    %v1923 = vadd.f32 0.0, %v1922
    %v1924 = vpop.f32.mrb[0].mxu0
    %1925 = vdwg.mxu0
    %1926 = vrot.lane.b32.xlu0 %v649, 112
    %v1927 = vpop.permute.xlu0 %1926
    %v1930 = vsel %vm655, %v1393, 0
    %1932 = vmatprep.subr.mxu0 0.0
    %1933 = vmatpush1.msra.mxu0 %v1927
    %1934 = vmatprep.subr.mxu0 0.0
    %1935 = vmatpush1.msra.mxu0 0.0
    %1936 = vmatprep.subr.mxu0 0.0
    %1937 = vmatpush1.msra.mxu0 0.0
    %1938 = vmatprep.subr.mxu0 0.0
    %1939 = vmatpush1.msra.mxu0 0.0
    %1940 = vmatprep.subr.mxu0 0.0
    %1941 = vmatpush1.msra.mxu0 0.0
    %1942 = vmatprep.subr.mxu0 0.0
    %1943 = vmatpush1.msra.mxu0 0.0
    %1944 = vmatprep.subr.mxu0 0.0
    %1945 = vmatpush1.msra.mxu0 0.0
    %1946 = vmatprep.subr.mxu0 0.0
    %1947 = vmatpush1.msra.mxu0 0.0
    %1948 = vmatprep.subr.mxu0 0.0
    %1949 = vmatpush1.msra.mxu0 0.0
    %1950 = vmatprep.subr.mxu0 0.0
    %1951 = vmatpush1.msra.mxu0 0.0
    %1952 = vmatprep.subr.mxu0 0.0
    %1953 = vmatpush1.msra.mxu0 0.0
    %1954 = vmatprep.subr.mxu0 0.0
    %1955 = vmatpush1.msra.mxu0 0.0
    %1956 = vmatprep.subr.mxu0 0.0
    %1957 = vmatpush1.msra.mxu0 0.0
    %1958 = vmatprep.subr.mxu0 0.0
    %1959 = vmatpush1.msra.mxu0 0.0
    %1960 = vmatprep.subr.mxu0 0.0
    %1961 = vmatpush1.msra.mxu0 0.0
    %1962 = vmatprep.subr.mxu0 0.0
    %1963 = vmatpush1.msra.mxu0 0.0
    %1964 = vmatprep.subr.mxu0 0.0
    %1965 = vmatpush1.msra.mxu0 0.0
    %1966 = vmatprep.subr.mxu0 0.0
    %1967 = vmatpush1.msra.mxu0 0.0
    %1968 = vmatprep.subr.mxu0 0.0
    %1969 = vmatpush1.msra.mxu0 0.0
    %1970 = vmatprep.subr.mxu0 0.0
    %1971 = vmatpush1.msra.mxu0 0.0
    %1972 = vmatprep.subr.mxu0 0.0
    %1973 = vmatpush1.msra.mxu0 0.0
    %1974 = vmatprep.subr.mxu0 0.0
    %1975 = vmatpush1.msra.mxu0 0.0
    %1976 = vmatprep.subr.mxu0 0.0
    %1977 = vmatpush1.msra.mxu0 0.0
    %1978 = vmatprep.subr.mxu0 0.0
    %1979 = vmatpush1.msra.mxu0 0.0
    %1980 = vmatprep.subr.mxu0 0.0
    %1981 = vmatpush1.msra.mxu0 0.0
    %1982 = vmatprep.subr.mxu0 0.0
    %1983 = vmatpush1.msra.mxu0 0.0
    %1984 = vmatprep.subr.mxu0 0.0
    %1985 = vmatpush1.msra.mxu0 0.0
    %1986 = vmatprep.subr.mxu0 0.0
    %1987 = vmatpush1.msra.mxu0 0.0
    %1988 = vmatprep.subr.mxu0 0.0
    %1989 = vmatpush1.msra.mxu0 0.0
    %1990 = vmatprep.subr.mxu0 0.0
    %1991 = vmatpush1.msra.mxu0 0.0
    %1992 = vmatprep.subr.mxu0 0.0
    %1993 = vmatpush1.msra.mxu0 0.0
    %1994 = vmatprep.subr.mxu0 0.0
    %1995 = vmatpush1.msra.mxu0 0.0
    %1996 = vmatprep.mubr.f32.mxu0 0.0
    %1997 = vmatmul.mubr.f32.gmra.mrb[0].mxu0 %v1930
    %v1998 = vpop.f32.mrb[0].mxu0
    %v1999 = vadd.f32 0.0, %v1998
    %v2000 = vpop.f32.mrb[0].mxu0
    %2001 = vdwg.mxu0
    %v2002 = vld [vmem:[%s2] sm:$0xff]
    %v2003 = vld [vmem:[%s2 + $0x8] sm:$0xff]
    %v2004 = vld [vmem:[%s2 + $0x10] sm:$0xff]
    %v2005 = vld [vmem:[%s2 + $0x18] sm:$0xff]
    %v2007 = vsel %vm655, %v1467, 0
    %2009 = vmatprep.subr.mxu0 0.0
    %2010 = vmatpush1.msra.mxu0 %v2002
    %2011 = vmatprep.subr.mxu0 0.0
    %2012 = vmatpush1.msra.mxu0 0.0
    %2013 = vmatprep.subr.mxu0 0.0
    %2014 = vmatpush1.msra.mxu0 0.0
    %2015 = vmatprep.subr.mxu0 0.0
    %2016 = vmatpush1.msra.mxu0 0.0
    %2017 = vmatprep.subr.mxu0 0.0
    %2018 = vmatpush1.msra.mxu0 0.0
    %2019 = vmatprep.subr.mxu0 0.0
    %2020 = vmatpush1.msra.mxu0 0.0
    %2021 = vmatprep.subr.mxu0 0.0
    %2022 = vmatpush1.msra.mxu0 0.0
    %2023 = vmatprep.subr.mxu0 0.0
    %2024 = vmatpush1.msra.mxu0 0.0
    %2025 = vmatprep.subr.mxu0 0.0
    %2026 = vmatpush1.msra.mxu0 0.0
    %2027 = vmatprep.subr.mxu0 0.0
    %2028 = vmatpush1.msra.mxu0 0.0
    %2029 = vmatprep.subr.mxu0 0.0
    %2030 = vmatpush1.msra.mxu0 0.0
    %2031 = vmatprep.subr.mxu0 0.0
    %2032 = vmatpush1.msra.mxu0 0.0
    %2033 = vmatprep.subr.mxu0 0.0
    %2034 = vmatpush1.msra.mxu0 0.0
    %2035 = vmatprep.subr.mxu0 0.0
    %2036 = vmatpush1.msra.mxu0 0.0
    %2037 = vmatprep.subr.mxu0 0.0
    %2038 = vmatpush1.msra.mxu0 0.0
    %2039 = vmatprep.subr.mxu0 0.0
    %2040 = vmatpush1.msra.mxu0 0.0
    %2041 = vmatprep.subr.mxu0 0.0
    %2042 = vmatpush1.msra.mxu0 0.0
    %2043 = vmatprep.subr.mxu0 0.0
    %2044 = vmatpush1.msra.mxu0 0.0
    %2045 = vmatprep.subr.mxu0 0.0
    %2046 = vmatpush1.msra.mxu0 0.0
    %2047 = vmatprep.subr.mxu0 0.0
    %2048 = vmatpush1.msra.mxu0 0.0
    %2049 = vmatprep.subr.mxu0 0.0
    %2050 = vmatpush1.msra.mxu0 0.0
    %2051 = vmatprep.subr.mxu0 0.0
    %2052 = vmatpush1.msra.mxu0 0.0
    %2053 = vmatprep.subr.mxu0 0.0
    %2054 = vmatpush1.msra.mxu0 0.0
    %2055 = vmatprep.subr.mxu0 0.0
    %2056 = vmatpush1.msra.mxu0 0.0
    %2057 = vmatprep.subr.mxu0 0.0
    %2058 = vmatpush1.msra.mxu0 0.0
    %2059 = vmatprep.subr.mxu0 0.0
    %2060 = vmatpush1.msra.mxu0 0.0
    %2061 = vmatprep.subr.mxu0 0.0
    %2062 = vmatpush1.msra.mxu0 0.0
    %2063 = vmatprep.subr.mxu0 0.0
    %2064 = vmatpush1.msra.mxu0 0.0
    %2065 = vmatprep.subr.mxu0 0.0
    %2066 = vmatpush1.msra.mxu0 0.0
    %2067 = vmatprep.subr.mxu0 0.0
    %2068 = vmatpush1.msra.mxu0 0.0
    %2069 = vmatprep.subr.mxu0 0.0
    %2070 = vmatpush1.msra.mxu0 0.0
    %2071 = vmatprep.subr.mxu0 0.0
    %2072 = vmatpush1.msra.mxu0 0.0
    %2073 = vmatprep.mubr.f32.mxu0 0.0
    %2074 = vmatmul.mubr.f32.gmra.mrb[0].mxu0 %v2007
    %v2075 = vpop.f32.mrb[0].mxu0
    %v2076 = vadd.f32 0.0, %v2075
    %v2077 = vpop.f32.mrb[0].mxu0
    %2078 = vdwg.mxu0
    %v2080 = vsel %vm655, %v1543, 0
    %2082 = vmatprep.subr.mxu0 0.0
    %2083 = vmatpush1.msra.mxu0 %v2003
    %2084 = vmatprep.subr.mxu0 0.0
    %2085 = vmatpush1.msra.mxu0 0.0
    %2086 = vmatprep.subr.mxu0 0.0
    %2087 = vmatpush1.msra.mxu0 0.0
    %2088 = vmatprep.subr.mxu0 0.0
    %2089 = vmatpush1.msra.mxu0 0.0
    %2090 = vmatprep.subr.mxu0 0.0
    %2091 = vmatpush1.msra.mxu0 0.0
    %2092 = vmatprep.subr.mxu0 0.0
    %2093 = vmatpush1.msra.mxu0 0.0
    %2094 = vmatprep.subr.mxu0 0.0
    %2095 = vmatpush1.msra.mxu0 0.0
    %2096 = vmatprep.subr.mxu0 0.0
    %2097 = vmatpush1.msra.mxu0 0.0
    %2098 = vmatprep.subr.mxu0 0.0
    %2099 = vmatpush1.msra.mxu0 0.0
    %2100 = vmatprep.subr.mxu0 0.0
    %2101 = vmatpush1.msra.mxu0 0.0
    %2102 = vmatprep.subr.mxu0 0.0
    %2103 = vmatpush1.msra.mxu0 0.0
    %2104 = vmatprep.subr.mxu0 0.0
    %2105 = vmatpush1.msra.mxu0 0.0
    %2106 = vmatprep.subr.mxu0 0.0
    %2107 = vmatpush1.msra.mxu0 0.0
    %2108 = vmatprep.subr.mxu0 0.0
    %2109 = vmatpush1.msra.mxu0 0.0
    %2110 = vmatprep.subr.mxu0 0.0
    %2111 = vmatpush1.msra.mxu0 0.0
    %2112 = vmatprep.subr.mxu0 0.0
    %2113 = vmatpush1.msra.mxu0 0.0
    %2114 = vmatprep.subr.mxu0 0.0
    %2115 = vmatpush1.msra.mxu0 0.0
    %2116 = vmatprep.subr.mxu0 0.0
    %2117 = vmatpush1.msra.mxu0 0.0
    %2118 = vmatprep.subr.mxu0 0.0
    %2119 = vmatpush1.msra.mxu0 0.0
    %2120 = vmatprep.subr.mxu0 0.0
    %2121 = vmatpush1.msra.mxu0 0.0
    %2122 = vmatprep.subr.mxu0 0.0
    %2123 = vmatpush1.msra.mxu0 0.0
    %2124 = vmatprep.subr.mxu0 0.0
    %2125 = vmatpush1.msra.mxu0 0.0
    %2126 = vmatprep.subr.mxu0 0.0
    %2127 = vmatpush1.msra.mxu0 0.0
    %2128 = vmatprep.subr.mxu0 0.0
    %2129 = vmatpush1.msra.mxu0 0.0
    %2130 = vmatprep.subr.mxu0 0.0
    %2131 = vmatpush1.msra.mxu0 0.0
    %2132 = vmatprep.subr.mxu0 0.0
    %2133 = vmatpush1.msra.mxu0 0.0
    %2134 = vmatprep.subr.mxu0 0.0
    %2135 = vmatpush1.msra.mxu0 0.0
    %2136 = vmatprep.subr.mxu0 0.0
    %2137 = vmatpush1.msra.mxu0 0.0
    %2138 = vmatprep.subr.mxu0 0.0
    %2139 = vmatpush1.msra.mxu0 0.0
    %2140 = vmatprep.subr.mxu0 0.0
    %2141 = vmatpush1.msra.mxu0 0.0
    %2142 = vmatprep.subr.mxu0 0.0
    %2143 = vmatpush1.msra.mxu0 0.0
    %2144 = vmatprep.subr.mxu0 0.0
    %2145 = vmatpush1.msra.mxu0 0.0
    %2146 = vmatprep.mubr.f32.mxu0 0.0
    %2147 = vmatmul.mubr.f32.gmra.mrb[0].mxu0 %v2080
    %v2148 = vpop.f32.mrb[0].mxu0
    %v2149 = vadd.f32 0.0, %v2148
    %v2150 = vpop.f32.mrb[0].mxu0
    %2151 = vdwg.mxu0
    %v2153 = vsel %vm655, %v1619, 0
    %2155 = vmatprep.subr.mxu0 0.0
    %2156 = vmatpush1.msra.mxu0 %v2004
    %2157 = vmatprep.subr.mxu0 0.0
    %2158 = vmatpush1.msra.mxu0 0.0
    %2159 = vmatprep.subr.mxu0 0.0
    %2160 = vmatpush1.msra.mxu0 0.0
    %2161 = vmatprep.subr.mxu0 0.0
    %2162 = vmatpush1.msra.mxu0 0.0
    %2163 = vmatprep.subr.mxu0 0.0
    %2164 = vmatpush1.msra.mxu0 0.0
    %2165 = vmatprep.subr.mxu0 0.0
    %2166 = vmatpush1.msra.mxu0 0.0
    %2167 = vmatprep.subr.mxu0 0.0
    %2168 = vmatpush1.msra.mxu0 0.0
    %2169 = vmatprep.subr.mxu0 0.0
    %2170 = vmatpush1.msra.mxu0 0.0
    %2171 = vmatprep.subr.mxu0 0.0
    %2172 = vmatpush1.msra.mxu0 0.0
    %2173 = vmatprep.subr.mxu0 0.0
    %2174 = vmatpush1.msra.mxu0 0.0
    %2175 = vmatprep.subr.mxu0 0.0
    %2176 = vmatpush1.msra.mxu0 0.0
    %2177 = vmatprep.subr.mxu0 0.0
    %2178 = vmatpush1.msra.mxu0 0.0
    %2179 = vmatprep.subr.mxu0 0.0
    %2180 = vmatpush1.msra.mxu0 0.0
    %2181 = vmatprep.subr.mxu0 0.0
    %2182 = vmatpush1.msra.mxu0 0.0
    %2183 = vmatprep.subr.mxu0 0.0
    %2184 = vmatpush1.msra.mxu0 0.0
    %2185 = vmatprep.subr.mxu0 0.0
    %2186 = vmatpush1.msra.mxu0 0.0
    %2187 = vmatprep.subr.mxu0 0.0
    %2188 = vmatpush1.msra.mxu0 0.0
    %2189 = vmatprep.subr.mxu0 0.0
    %2190 = vmatpush1.msra.mxu0 0.0
    %2191 = vmatprep.subr.mxu0 0.0
    %2192 = vmatpush1.msra.mxu0 0.0
    %2193 = vmatprep.subr.mxu0 0.0
    %2194 = vmatpush1.msra.mxu0 0.0
    %2195 = vmatprep.subr.mxu0 0.0
    %2196 = vmatpush1.msra.mxu0 0.0
    %2197 = vmatprep.subr.mxu0 0.0
    %2198 = vmatpush1.msra.mxu0 0.0
    %2199 = vmatprep.subr.mxu0 0.0
    %2200 = vmatpush1.msra.mxu0 0.0
    %2201 = vmatprep.subr.mxu0 0.0
    %2202 = vmatpush1.msra.mxu0 0.0
    %2203 = vmatprep.subr.mxu0 0.0
    %2204 = vmatpush1.msra.mxu0 0.0
    %2205 = vmatprep.subr.mxu0 0.0
    %2206 = vmatpush1.msra.mxu0 0.0
    %2207 = vmatprep.subr.mxu0 0.0
    %2208 = vmatpush1.msra.mxu0 0.0
    %2209 = vmatprep.subr.mxu0 0.0
    %2210 = vmatpush1.msra.mxu0 0.0
    %2211 = vmatprep.subr.mxu0 0.0
    %2212 = vmatpush1.msra.mxu0 0.0
    %2213 = vmatprep.subr.mxu0 0.0
    %2214 = vmatpush1.msra.mxu0 0.0
    %2215 = vmatprep.subr.mxu0 0.0
    %2216 = vmatpush1.msra.mxu0 0.0
    %2217 = vmatprep.subr.mxu0 0.0
    %2218 = vmatpush1.msra.mxu0 0.0
    %2219 = vmatprep.mubr.f32.mxu0 0.0
    %2220 = vmatmul.mubr.f32.gmra.mrb[0].mxu0 %v2153
    %v2221 = vpop.f32.mrb[0].mxu0
    %v2222 = vadd.f32 0.0, %v2221
    %v2223 = vpop.f32.mrb[0].mxu0
    %2224 = vdwg.mxu0
    %v2226 = vsel %vm655, %v1695, 0
    %2228 = vmatprep.subr.mxu0 0.0
    %2229 = vmatpush1.msra.mxu0 %v2005
    %2230 = vmatprep.subr.mxu0 0.0
    %2231 = vmatpush1.msra.mxu0 0.0
    %2232 = vmatprep.subr.mxu0 0.0
    %2233 = vmatpush1.msra.mxu0 0.0
    %2234 = vmatprep.subr.mxu0 0.0
    %2235 = vmatpush1.msra.mxu0 0.0
    %2236 = vmatprep.subr.mxu0 0.0
    %2237 = vmatpush1.msra.mxu0 0.0
    %2238 = vmatprep.subr.mxu0 0.0
    %2239 = vmatpush1.msra.mxu0 0.0
    %2240 = vmatprep.subr.mxu0 0.0
    %2241 = vmatpush1.msra.mxu0 0.0
    %2242 = vmatprep.subr.mxu0 0.0
    %2243 = vmatpush1.msra.mxu0 0.0
    %2244 = vmatprep.subr.mxu0 0.0
    %2245 = vmatpush1.msra.mxu0 0.0
    %2246 = vmatprep.subr.mxu0 0.0
    %2247 = vmatpush1.msra.mxu0 0.0
    %2248 = vmatprep.subr.mxu0 0.0
    %2249 = vmatpush1.msra.mxu0 0.0
    %2250 = vmatprep.subr.mxu0 0.0
    %2251 = vmatpush1.msra.mxu0 0.0
    %2252 = vmatprep.subr.mxu0 0.0
    %2253 = vmatpush1.msra.mxu0 0.0
    %2254 = vmatprep.subr.mxu0 0.0
    %2255 = vmatpush1.msra.mxu0 0.0
    %2256 = vmatprep.subr.mxu0 0.0
    %2257 = vmatpush1.msra.mxu0 0.0
    %2258 = vmatprep.subr.mxu0 0.0
    %2259 = vmatpush1.msra.mxu0 0.0
    %2260 = vmatprep.subr.mxu0 0.0
    %2261 = vmatpush1.msra.mxu0 0.0
    %2262 = vmatprep.subr.mxu0 0.0
    %2263 = vmatpush1.msra.mxu0 0.0
    %2264 = vmatprep.subr.mxu0 0.0
    %2265 = vmatpush1.msra.mxu0 0.0
    %2266 = vmatprep.subr.mxu0 0.0
    %2267 = vmatpush1.msra.mxu0 0.0
    %2268 = vmatprep.subr.mxu0 0.0
    %2269 = vmatpush1.msra.mxu0 0.0
    %2270 = vmatprep.subr.mxu0 0.0
    %2271 = vmatpush1.msra.mxu0 0.0
    %2272 = vmatprep.subr.mxu0 0.0
    %2273 = vmatpush1.msra.mxu0 0.0
    %2274 = vmatprep.subr.mxu0 0.0
    %2275 = vmatpush1.msra.mxu0 0.0
    %2276 = vmatprep.subr.mxu0 0.0
    %2277 = vmatpush1.msra.mxu0 0.0
    %2278 = vmatprep.subr.mxu0 0.0
    %2279 = vmatpush1.msra.mxu0 0.0
    %2280 = vmatprep.subr.mxu0 0.0
    %2281 = vmatpush1.msra.mxu0 0.0
    %2282 = vmatprep.subr.mxu0 0.0
    %2283 = vmatpush1.msra.mxu0 0.0
    %2284 = vmatprep.subr.mxu0 0.0
    %2285 = vmatpush1.msra.mxu0 0.0
    %2286 = vmatprep.subr.mxu0 0.0
    %2287 = vmatpush1.msra.mxu0 0.0
    %2288 = vmatprep.subr.mxu0 0.0
    %2289 = vmatpush1.msra.mxu0 0.0
    %2290 = vmatprep.subr.mxu0 0.0
    %2291 = vmatpush1.msra.mxu0 0.0
    %2292 = vmatprep.mubr.f32.mxu0 0.0
    %2293 = vmatmul.mubr.f32.gmra.mrb[0].mxu0 %v2226
    %v2294 = vpop.f32.mrb[0].mxu0
    %v2295 = vadd.f32 0.0, %v2294
    %v2296 = vpop.f32.mrb[0].mxu0
    %2297 = vdwg.mxu0
    %v2299 = vsel %vm655, %v1771, 0
    %2301 = vmatprep.subr.mxu0 0.0
    %2302 = vmatpush1.msra.mxu0 %v2002
    %2303 = vmatprep.subr.mxu0 0.0
    %2304 = vmatpush1.msra.mxu0 0.0
    %2305 = vmatprep.subr.mxu0 0.0
    %2306 = vmatpush1.msra.mxu0 0.0
    %2307 = vmatprep.subr.mxu0 0.0
    %2308 = vmatpush1.msra.mxu0 0.0
    %2309 = vmatprep.subr.mxu0 0.0
    %2310 = vmatpush1.msra.mxu0 0.0
    %2311 = vmatprep.subr.mxu0 0.0
    %2312 = vmatpush1.msra.mxu0 0.0
    %2313 = vmatprep.subr.mxu0 0.0
    %2314 = vmatpush1.msra.mxu0 0.0
    %2315 = vmatprep.subr.mxu0 0.0
    %2316 = vmatpush1.msra.mxu0 0.0
    %2317 = vmatprep.subr.mxu0 0.0
    %2318 = vmatpush1.msra.mxu0 0.0
    %2319 = vmatprep.subr.mxu0 0.0
    %2320 = vmatpush1.msra.mxu0 0.0
    %2321 = vmatprep.subr.mxu0 0.0
    %2322 = vmatpush1.msra.mxu0 0.0
    %2323 = vmatprep.subr.mxu0 0.0
    %2324 = vmatpush1.msra.mxu0 0.0
    %2325 = vmatprep.subr.mxu0 0.0
    %2326 = vmatpush1.msra.mxu0 0.0
    %2327 = vmatprep.subr.mxu0 0.0
    %2328 = vmatpush1.msra.mxu0 0.0
    %2329 = vmatprep.subr.mxu0 0.0
    %2330 = vmatpush1.msra.mxu0 0.0
    %2331 = vmatprep.subr.mxu0 0.0
    %2332 = vmatpush1.msra.mxu0 0.0
    %2333 = vmatprep.subr.mxu0 0.0
    %2334 = vmatpush1.msra.mxu0 0.0
    %2335 = vmatprep.subr.mxu0 0.0
    %2336 = vmatpush1.msra.mxu0 0.0
    %2337 = vmatprep.subr.mxu0 0.0
    %2338 = vmatpush1.msra.mxu0 0.0
    %2339 = vmatprep.subr.mxu0 0.0
    %2340 = vmatpush1.msra.mxu0 0.0
    %2341 = vmatprep.subr.mxu0 0.0
    %2342 = vmatpush1.msra.mxu0 0.0
    %2343 = vmatprep.subr.mxu0 0.0
    %2344 = vmatpush1.msra.mxu0 0.0
    %2345 = vmatprep.subr.mxu0 0.0
    %2346 = vmatpush1.msra.mxu0 0.0
    %2347 = vmatprep.subr.mxu0 0.0
    %2348 = vmatpush1.msra.mxu0 0.0
    %2349 = vmatprep.subr.mxu0 0.0
    %2350 = vmatpush1.msra.mxu0 0.0
    %2351 = vmatprep.subr.mxu0 0.0
    %2352 = vmatpush1.msra.mxu0 0.0
    %2353 = vmatprep.subr.mxu0 0.0
    %2354 = vmatpush1.msra.mxu0 0.0
    %2355 = vmatprep.subr.mxu0 0.0
    %2356 = vmatpush1.msra.mxu0 0.0
    %2357 = vmatprep.subr.mxu0 0.0
    %2358 = vmatpush1.msra.mxu0 0.0
    %2359 = vmatprep.subr.mxu0 0.0
    %2360 = vmatpush1.msra.mxu0 0.0
    %2361 = vmatprep.subr.mxu0 0.0
    %2362 = vmatpush1.msra.mxu0 0.0
    %2363 = vmatprep.subr.mxu0 0.0
    %2364 = vmatpush1.msra.mxu0 0.0
    %2365 = vmatprep.mubr.f32.mxu0 0.0
    %2366 = vmatmul.mubr.f32.gmra.mrb[0].mxu0 %v2299
    %v2367 = vpop.f32.mrb[0].mxu0
    %v2368 = vadd.f32 0.0, %v2367
    %v2369 = vpop.f32.mrb[0].mxu0
    %2370 = vdwg.mxu0
    %v2372 = vsel %vm655, %v1847, 0
    %2374 = vmatprep.subr.mxu0 0.0
    %2375 = vmatpush1.msra.mxu0 %v2003
    %2376 = vmatprep.subr.mxu0 0.0
    %2377 = vmatpush1.msra.mxu0 0.0
    %2378 = vmatprep.subr.mxu0 0.0
    %2379 = vmatpush1.msra.mxu0 0.0
    %2380 = vmatprep.subr.mxu0 0.0
    %2381 = vmatpush1.msra.mxu0 0.0
    %2382 = vmatprep.subr.mxu0 0.0
    %2383 = vmatpush1.msra.mxu0 0.0
    %2384 = vmatprep.subr.mxu0 0.0
    %2385 = vmatpush1.msra.mxu0 0.0
    %2386 = vmatprep.subr.mxu0 0.0
    %2387 = vmatpush1.msra.mxu0 0.0
    %2388 = vmatprep.subr.mxu0 0.0
    %2389 = vmatpush1.msra.mxu0 0.0
    %2390 = vmatprep.subr.mxu0 0.0
    %2391 = vmatpush1.msra.mxu0 0.0
    %2392 = vmatprep.subr.mxu0 0.0
    %2393 = vmatpush1.msra.mxu0 0.0
    %2394 = vmatprep.subr.mxu0 0.0
    %2395 = vmatpush1.msra.mxu0 0.0
    %2396 = vmatprep.subr.mxu0 0.0
    %2397 = vmatpush1.msra.mxu0 0.0
    %2398 = vmatprep.subr.mxu0 0.0
    %2399 = vmatpush1.msra.mxu0 0.0
    %2400 = vmatprep.subr.mxu0 0.0
    %2401 = vmatpush1.msra.mxu0 0.0
    %2402 = vmatprep.subr.mxu0 0.0
    %2403 = vmatpush1.msra.mxu0 0.0
    %2404 = vmatprep.subr.mxu0 0.0
    %2405 = vmatpush1.msra.mxu0 0.0
    %2406 = vmatprep.subr.mxu0 0.0
    %2407 = vmatpush1.msra.mxu0 0.0
    %2408 = vmatprep.subr.mxu0 0.0
    %2409 = vmatpush1.msra.mxu0 0.0
    %2410 = vmatprep.subr.mxu0 0.0
    %2411 = vmatpush1.msra.mxu0 0.0
    %2412 = vmatprep.subr.mxu0 0.0
    %2413 = vmatpush1.msra.mxu0 0.0
    %2414 = vmatprep.subr.mxu0 0.0
    %2415 = vmatpush1.msra.mxu0 0.0
    %2416 = vmatprep.subr.mxu0 0.0
    %2417 = vmatpush1.msra.mxu0 0.0
    %2418 = vmatprep.subr.mxu0 0.0
    %2419 = vmatpush1.msra.mxu0 0.0
    %2420 = vmatprep.subr.mxu0 0.0
    %2421 = vmatpush1.msra.mxu0 0.0
    %2422 = vmatprep.subr.mxu0 0.0
    %2423 = vmatpush1.msra.mxu0 0.0
    %2424 = vmatprep.subr.mxu0 0.0
    %2425 = vmatpush1.msra.mxu0 0.0
    %2426 = vmatprep.subr.mxu0 0.0
    %2427 = vmatpush1.msra.mxu0 0.0
    %2428 = vmatprep.subr.mxu0 0.0
    %2429 = vmatpush1.msra.mxu0 0.0
    %2430 = vmatprep.subr.mxu0 0.0
    %2431 = vmatpush1.msra.mxu0 0.0
    %2432 = vmatprep.subr.mxu0 0.0
    %2433 = vmatpush1.msra.mxu0 0.0
    %2434 = vmatprep.subr.mxu0 0.0
    %2435 = vmatpush1.msra.mxu0 0.0
    %2436 = vmatprep.subr.mxu0 0.0
    %2437 = vmatpush1.msra.mxu0 0.0
    %2438 = vmatprep.mubr.f32.mxu0 0.0
    %2439 = vmatmul.mubr.f32.gmra.mrb[0].mxu0 %v2372
    %v2440 = vpop.f32.mrb[0].mxu0
    %v2441 = vadd.f32 0.0, %v2440
    %v2442 = vpop.f32.mrb[0].mxu0
    %2443 = vdwg.mxu0
    %v2445 = vsel %vm655, %v1923, 0
    %2447 = vmatprep.subr.mxu0 0.0
    %2448 = vmatpush1.msra.mxu0 %v2004
    %2449 = vmatprep.subr.mxu0 0.0
    %2450 = vmatpush1.msra.mxu0 0.0
    %2451 = vmatprep.subr.mxu0 0.0
    %2452 = vmatpush1.msra.mxu0 0.0
    %2453 = vmatprep.subr.mxu0 0.0
    %2454 = vmatpush1.msra.mxu0 0.0
    %2455 = vmatprep.subr.mxu0 0.0
    %2456 = vmatpush1.msra.mxu0 0.0
    %2457 = vmatprep.subr.mxu0 0.0
    %2458 = vmatpush1.msra.mxu0 0.0
    %2459 = vmatprep.subr.mxu0 0.0
    %2460 = vmatpush1.msra.mxu0 0.0
    %2461 = vmatprep.subr.mxu0 0.0
    %2462 = vmatpush1.msra.mxu0 0.0
    %2463 = vmatprep.subr.mxu0 0.0
    %2464 = vmatpush1.msra.mxu0 0.0
    %2465 = vmatprep.subr.mxu0 0.0
    %2466 = vmatpush1.msra.mxu0 0.0
    %2467 = vmatprep.subr.mxu0 0.0
    %2468 = vmatpush1.msra.mxu0 0.0
    %2469 = vmatprep.subr.mxu0 0.0
    %2470 = vmatpush1.msra.mxu0 0.0
    %2471 = vmatprep.subr.mxu0 0.0
    %2472 = vmatpush1.msra.mxu0 0.0
    %2473 = vmatprep.subr.mxu0 0.0
    %2474 = vmatpush1.msra.mxu0 0.0
    %2475 = vmatprep.subr.mxu0 0.0
    %2476 = vmatpush1.msra.mxu0 0.0
    %2477 = vmatprep.subr.mxu0 0.0
    %2478 = vmatpush1.msra.mxu0 0.0
    %2479 = vmatprep.subr.mxu0 0.0
    %2480 = vmatpush1.msra.mxu0 0.0
    %2481 = vmatprep.subr.mxu0 0.0
    %2482 = vmatpush1.msra.mxu0 0.0
    %2483 = vmatprep.subr.mxu0 0.0
    %2484 = vmatpush1.msra.mxu0 0.0
    %2485 = vmatprep.subr.mxu0 0.0
    %2486 = vmatpush1.msra.mxu0 0.0
    %2487 = vmatprep.subr.mxu0 0.0
    %2488 = vmatpush1.msra.mxu0 0.0
    %2489 = vmatprep.subr.mxu0 0.0
    %2490 = vmatpush1.msra.mxu0 0.0
    %2491 = vmatprep.subr.mxu0 0.0
    %2492 = vmatpush1.msra.mxu0 0.0
    %2493 = vmatprep.subr.mxu0 0.0
    %2494 = vmatpush1.msra.mxu0 0.0
    %2495 = vmatprep.subr.mxu0 0.0
    %2496 = vmatpush1.msra.mxu0 0.0
    %2497 = vmatprep.subr.mxu0 0.0
    %2498 = vmatpush1.msra.mxu0 0.0
    %2499 = vmatprep.subr.mxu0 0.0
    %2500 = vmatpush1.msra.mxu0 0.0
    %2501 = vmatprep.subr.mxu0 0.0
    %2502 = vmatpush1.msra.mxu0 0.0
    %2503 = vmatprep.subr.mxu0 0.0
    %2504 = vmatpush1.msra.mxu0 0.0
    %2505 = vmatprep.subr.mxu0 0.0
    %2506 = vmatpush1.msra.mxu0 0.0
    %2507 = vmatprep.subr.mxu0 0.0
    %2508 = vmatpush1.msra.mxu0 0.0
    %2509 = vmatprep.subr.mxu0 0.0
    %2510 = vmatpush1.msra.mxu0 0.0
    %2511 = vmatprep.mubr.f32.mxu0 0.0
    %2512 = vmatmul.mubr.f32.gmra.mrb[0].mxu0 %v2445
    %v2513 = vpop.f32.mrb[0].mxu0
    %v2514 = vadd.f32 0.0, %v2513
    %v2515 = vpop.f32.mrb[0].mxu0
    %2516 = vdwg.mxu0
    %v2518 = vsel %vm655, %v1999, 0
    %2520 = vmatprep.subr.mxu0 0.0
    %2521 = vmatpush1.msra.mxu0 %v2005
    %2522 = vmatprep.subr.mxu0 0.0
    %2523 = vmatpush1.msra.mxu0 0.0
    %2524 = vmatprep.subr.mxu0 0.0
    %2525 = vmatpush1.msra.mxu0 0.0
    %2526 = vmatprep.subr.mxu0 0.0
    %2527 = vmatpush1.msra.mxu0 0.0
    %2528 = vmatprep.subr.mxu0 0.0
    %2529 = vmatpush1.msra.mxu0 0.0
    %2530 = vmatprep.subr.mxu0 0.0
    %2531 = vmatpush1.msra.mxu0 0.0
    %2532 = vmatprep.subr.mxu0 0.0
    %2533 = vmatpush1.msra.mxu0 0.0
    %2534 = vmatprep.subr.mxu0 0.0
    %2535 = vmatpush1.msra.mxu0 0.0
    %2536 = vmatprep.subr.mxu0 0.0
    %2537 = vmatpush1.msra.mxu0 0.0
    %2538 = vmatprep.subr.mxu0 0.0
    %2539 = vmatpush1.msra.mxu0 0.0
    %2540 = vmatprep.subr.mxu0 0.0
    %2541 = vmatpush1.msra.mxu0 0.0
    %2542 = vmatprep.subr.mxu0 0.0
    %2543 = vmatpush1.msra.mxu0 0.0
    %2544 = vmatprep.subr.mxu0 0.0
    %2545 = vmatpush1.msra.mxu0 0.0
    %2546 = vmatprep.subr.mxu0 0.0
    %2547 = vmatpush1.msra.mxu0 0.0
    %2548 = vmatprep.subr.mxu0 0.0
    %2549 = vmatpush1.msra.mxu0 0.0
    %2550 = vmatprep.subr.mxu0 0.0
    %2551 = vmatpush1.msra.mxu0 0.0
    %2552 = vmatprep.subr.mxu0 0.0
    %2553 = vmatpush1.msra.mxu0 0.0
    %2554 = vmatprep.subr.mxu0 0.0
    %2555 = vmatpush1.msra.mxu0 0.0
    %2556 = vmatprep.subr.mxu0 0.0
    %2557 = vmatpush1.msra.mxu0 0.0
    %2558 = vmatprep.subr.mxu0 0.0
    %2559 = vmatpush1.msra.mxu0 0.0
    %2560 = vmatprep.subr.mxu0 0.0
    %2561 = vmatpush1.msra.mxu0 0.0
    %2562 = vmatprep.subr.mxu0 0.0
    %2563 = vmatpush1.msra.mxu0 0.0
    %2564 = vmatprep.subr.mxu0 0.0
    %2565 = vmatpush1.msra.mxu0 0.0
    %2566 = vmatprep.subr.mxu0 0.0
    %2567 = vmatpush1.msra.mxu0 0.0
    %2568 = vmatprep.subr.mxu0 0.0
    %2569 = vmatpush1.msra.mxu0 0.0
    %2570 = vmatprep.subr.mxu0 0.0
    %2571 = vmatpush1.msra.mxu0 0.0
    %2572 = vmatprep.subr.mxu0 0.0
    %2573 = vmatpush1.msra.mxu0 0.0
    %2574 = vmatprep.subr.mxu0 0.0
    %2575 = vmatpush1.msra.mxu0 0.0
    %2576 = vmatprep.subr.mxu0 0.0
    %2577 = vmatpush1.msra.mxu0 0.0
    %2578 = vmatprep.subr.mxu0 0.0
    %2579 = vmatpush1.msra.mxu0 0.0
    %2580 = vmatprep.subr.mxu0 0.0
    %2581 = vmatpush1.msra.mxu0 0.0
    %2582 = vmatprep.subr.mxu0 0.0
    %2583 = vmatpush1.msra.mxu0 0.0
    %2584 = vmatprep.mubr.f32.mxu0 0.0
    %2585 = vmatmul.mubr.f32.gmra.mrb[0].mxu0 %v2518
    %v2586 = vpop.f32.mrb[0].mxu0
    %v2587 = vadd.f32 0.0, %v2586
    %v2588 = vpop.f32.mrb[0].mxu0
    %2589 = vdwg.mxu0
    %v2590 = vsel %vm27, %v2076, 0.0
    %v2591 = vsel %vm27, %v2149, 0.0
    %v2592 = vadd.f32 %v2590, %v2591
    %v2593 = vsel %vm27, %v2222, 0.0
    %v2594 = vadd.f32 %v2592, %v2593
    %v2595 = vsel %vm27, %v2295, 0.0
    %v2596 = vadd.f32 %v2594, %v2595
    %v2597 = vsel %vm27, %v2368, 0.0
    %v2598 = vsel %vm27, %v2441, 0.0
    %v2599 = vadd.f32 %v2597, %v2598
    %v2600 = vsel %vm27, %v2514, 0.0
    %v2601 = vadd.f32 %v2599, %v2600
    %v2602 = vsel %vm27, %v2587, 0.0
    %v2603 = vadd.f32 %v2601, %v2602
    %v2604 = vsel %vm27, %v2596, 0.0
    %2605 = vadd.xlane.f32.xlu0 %v2604
    %v2606 = vpop.xlane.xlu0 %2605
    %v2607 = vsel %vm27, %v2603, 0.0
    %2608 = vadd.xlane.f32.xlu0 %v2607
    %v2609 = vpop.xlane.xlu0 %2608
    %v2610 = vmul.f32 %v2596, %v2596
    %v2611 = vmul.f32 %v2603, %v2603
    %v2612 = vsel %vm27, %v2610, 0.0
    %2613 = vadd.xlane.f32.xlu0 %v2612
    %v2614 = vpop.xlane.xlu0 %2613
    %v2615 = vsel %vm27, %v2611, 0.0
    %2616 = vadd.xlane.f32.xlu0 %v2615
    %v2617 = vpop.xlane.xlu0 %2616
    %v2618 = vmul.f32 %v2606, 0.03125
    %v2619 = vmul.f32 %v2609, 0.03125
    %v2620 = vmul.f32 %v2614, 0.03125
    %v2621 = vmul.f32 %v2617, 0.03125
    %v2622 = vmul.f32 %v2618, %v2618
    %v2623 = vmul.f32 %v2619, %v2619
    %v2624 = vsub.f32 %v2620, %v2622
    %v2625 = vsub.f32 %v2621, %v2623
    %v2626 = vsub.f32 %v2596, %v2618
    %v2627 = vsub.f32 %v2603, %v2619
    %v2628 = vadd.f32 %v2624, 1e-05
    %v2629 = vadd.f32 %v2625, 1e-05
    %v2630 = vrsqrt.pop %v2628
    %v2631 = vrsqrt.pop %v2629
    %v2632 = vmul.f32 %v2626, %v2630
    %v2633 = vmul.f32 %v2627, %v2631
    %v2634 = vmul.f32 %v2632, %v61
    %v2635 = vmul.f32 %v2633, %v61
    %v2636 = vadd.f32 %v2634, %v67
    %v2637 = vadd.f32 %v2635, %v67
    %v2638 = vadd.f32 %v2636, %v68
    %v2639 = vadd.f32 %v2637, %v69
    %v2640 = vsel %vm27, %v2638, 0.0
    %2641 = vadd.xlane.f32.xlu0 %v2640
    %v2642 = vpop.xlane.xlu0 %2641
    %v2643 = vsel %vm27, %v2639, 0.0
    %2644 = vadd.xlane.f32.xlu0 %v2643
    %v2645 = vpop.xlane.xlu0 %2644
    %v2646 = vmul.f32 %v2638, %v2638
    %v2647 = vmul.f32 %v2639, %v2639
    %v2648 = vsel %vm27, %v2646, 0.0
    %2649 = vadd.xlane.f32.xlu0 %v2648
    %v2650 = vpop.xlane.xlu0 %2649
    %v2651 = vsel %vm27, %v2647, 0.0
    %2652 = vadd.xlane.f32.xlu0 %v2651
    %v2653 = vpop.xlane.xlu0 %2652
    %v2654 = vmul.f32 %v2642, 0.03125
    %v2655 = vmul.f32 %v2645, 0.03125
    %v2656 = vmul.f32 %v2650, 0.03125
    %v2657 = vmul.f32 %v2653, 0.03125
    %v2658 = vmul.f32 %v2654, %v2654
    %v2659 = vmul.f32 %v2655, %v2655
    %v2660 = vsub.f32 %v2656, %v2658
    %v2661 = vsub.f32 %v2657, %v2659
    %v2662 = vsub.f32 %v2638, %v2654
    %v2663 = vsub.f32 %v2639, %v2655
    %v2664 = vadd.f32 %v2660, 1e-05
    %v2665 = vadd.f32 %v2661, 1e-05
    %v2666 = vrsqrt.pop %v2664
    %v2667 = vrsqrt.pop %v2665
    %v2668 = vmul.f32 %v2662, %v2666
    %v2669 = vmul.f32 %v2663, %v2667
    %v2670 = vlaneseq
    %v2671 = vshrl.u32 %v2670, 7
    %v2672 = vsub.s32 2, %v2671
    %v2673 = vrot.slane %v26, %v2672
    %v2674 = vmul.f32 %v2668, %v2673
    %v2675 = vmul.f32 %v2669, %v2673
    %v2676 = vlaneseq
    %v2677 = vshrl.u32 %v2676, 7
    %v2678 = vsub.s32 3, %v2677
    %v2679 = vrot.slane %v26, %v2678
    %v2680 = vadd.f32 %v2674, %v2679
    %v2681 = vadd.f32 %v2675, %v2679
    %v2682 = vld [vmem:[%s4] sm:$0xff]
    %v2683 = vld [vmem:[%s4 + $0x8] sm:$0xff]
    %v2684 = vld [vmem:[%s4 + $0x10] sm:$0xff]
    %v2685 = vld [vmem:[%s4 + $0x18] sm:$0xff]
    %v2687 = vsel %vm27, %v2638, 0
    %v2690 = vsel %vm27, %v2639, 0
    %2692 = vmatprep.subr.mxu0 0.0
    %2693 = vmatpush1.msra.mxu0 %v2682
    %2694 = vmatprep.subr.mxu0 0.0
    %2695 = vmatpush1.msra.mxu0 %v2683
    %2696 = vmatprep.subr.mxu0 0.0
    %2697 = vmatpush1.msra.mxu0 %v2684
    %2698 = vmatprep.subr.mxu0 0.0
    %2699 = vmatpush1.msra.mxu0 %v2685
    %2700 = vmatprep.subr.mxu0 0.0
    %2701 = vmatpush1.msra.mxu0 0.0
    %2702 = vmatprep.subr.mxu0 0.0
    %2703 = vmatpush1.msra.mxu0 0.0
    %2704 = vmatprep.subr.mxu0 0.0
    %2705 = vmatpush1.msra.mxu0 0.0
    %2706 = vmatprep.subr.mxu0 0.0
    %2707 = vmatpush1.msra.mxu0 0.0
    %2708 = vmatprep.subr.mxu0 0.0
    %2709 = vmatpush1.msra.mxu0 0.0
    %2710 = vmatprep.subr.mxu0 0.0
    %2711 = vmatpush1.msra.mxu0 0.0
    %2712 = vmatprep.subr.mxu0 0.0
    %2713 = vmatpush1.msra.mxu0 0.0
    %2714 = vmatprep.subr.mxu0 0.0
    %2715 = vmatpush1.msra.mxu0 0.0
    %2716 = vmatprep.subr.mxu0 0.0
    %2717 = vmatpush1.msra.mxu0 0.0
    %2718 = vmatprep.subr.mxu0 0.0
    %2719 = vmatpush1.msra.mxu0 0.0
    %2720 = vmatprep.subr.mxu0 0.0
    %2721 = vmatpush1.msra.mxu0 0.0
    %2722 = vmatprep.subr.mxu0 0.0
    %2723 = vmatpush1.msra.mxu0 0.0
    %2724 = vmatprep.subr.mxu0 0.0
    %2725 = vmatpush1.msra.mxu0 0.0
    %2726 = vmatprep.subr.mxu0 0.0
    %2727 = vmatpush1.msra.mxu0 0.0
    %2728 = vmatprep.subr.mxu0 0.0
    %2729 = vmatpush1.msra.mxu0 0.0
    %2730 = vmatprep.subr.mxu0 0.0
    %2731 = vmatpush1.msra.mxu0 0.0
    %2732 = vmatprep.subr.mxu0 0.0
    %2733 = vmatpush1.msra.mxu0 0.0
    %2734 = vmatprep.subr.mxu0 0.0
    %2735 = vmatpush1.msra.mxu0 0.0
    %2736 = vmatprep.subr.mxu0 0.0
    %2737 = vmatpush1.msra.mxu0 0.0
    %2738 = vmatprep.subr.mxu0 0.0
    %2739 = vmatpush1.msra.mxu0 0.0
    %2740 = vmatprep.subr.mxu0 0.0
    %2741 = vmatpush1.msra.mxu0 0.0
    %2742 = vmatprep.subr.mxu0 0.0
    %2743 = vmatpush1.msra.mxu0 0.0
    %2744 = vmatprep.subr.mxu0 0.0
    %2745 = vmatpush1.msra.mxu0 0.0
    %2746 = vmatprep.subr.mxu0 0.0
    %2747 = vmatpush1.msra.mxu0 0.0
    %2748 = vmatprep.subr.mxu0 0.0
    %2749 = vmatpush1.msra.mxu0 0.0
    %2750 = vmatprep.subr.mxu0 0.0
    %2751 = vmatpush1.msra.mxu0 0.0
    %2752 = vmatprep.subr.mxu0 0.0
    %2753 = vmatpush1.msra.mxu0 0.0
    %2754 = vmatprep.subr.mxu0 0.0
    %2755 = vmatpush1.msra.mxu0 0.0
    %2756 = vmatprep.mubr.f32.mxu0 0.0
    %2757 = vmatmul.mubr.f32.gmra.mrb[0].mxu0 %v2687
    %v2758 = vpop.f32.mrb[0].mxu0
    %v2759 = vadd.f32 0.0, %v2758
    %v2760 = vpop.f32.mrb[0].mxu0
    %2761 = vmatprep.mubr.f32.mxu0 0.0
    %2762 = vmatmul.mubr.f32.gmra.mrb[0].mxu0 %v2690
    %v2763 = vpop.f32.mrb[0].mxu0
    %v2764 = vadd.f32 0.0, %v2763
    %v2765 = vpop.f32.mrb[0].mxu0
    %2766 = vdwg.mxu0
    %v2767 = vxor.u32 %v2759, 2147483648
    %v2768 = vxor.u32 %v2764, 2147483648
    %v2769 = vmul.f32 %v2767, 1.442695
    %v2770 = vpow.pop %v2769
    %v2771 = vmul.f32 %v2768, 1.442695
    %v2772 = vpow.pop %v2771
    %v2773 = vadd.f32 %v2770, 1.0
    %v2774 = vadd.f32 %v2772, 1.0
    %v2775 = vrcp.pop %v2773
    %v2776 = vmul.f32 1.0, %v2775
    %v2777 = vrcp.pop %v2774
    %v2778 = vmul.f32 1.0, %v2777
    %v2779 = vmul.f32 %v2759, %v2776
    %v2780 = vmul.f32 %v2764, %v2778
    %2783 = vrot.lane.b32.xlu0 %v2759, 96
    %v2784 = vpop.permute.xlu0 %2783
    %2785 = vrot.lane.b32.xlu0 %v2764, 96
    %v2786 = vpop.permute.xlu0 %2785
    %v2789 = vmul.f32 %v2779, %v2784
    %v2790 = vmul.f32 %v2780, %v2786
    %v2791 = vld [vmem:[%s5] sm:$0xff]
    %v2792 = vld [vmem:[%s5 + $0x8] sm:$0xff]
    %v2793 = vld [vmem:[%s5 + $0x10] sm:$0xff]
    %v2794 = vld [vmem:[%s5 + $0x18] sm:$0xff]
    %v2796 = vsel %vm27, %v2789, 0
    %v2799 = vsel %vm27, %v2790, 0
    %2801 = vmatprep.subr.mxu0 0.0
    %2802 = vmatpush1.msra.mxu0 %v2791
    %2803 = vmatprep.subr.mxu0 0.0
    %2804 = vmatpush1.msra.mxu0 %v2792
    %2805 = vmatprep.subr.mxu0 0.0
    %2806 = vmatpush1.msra.mxu0 %v2793
    %2807 = vmatprep.subr.mxu0 0.0
    %2808 = vmatpush1.msra.mxu0 %v2794
    %2809 = vmatprep.subr.mxu0 0.0
    %2810 = vmatpush1.msra.mxu0 0.0
    %2811 = vmatprep.subr.mxu0 0.0
    %2812 = vmatpush1.msra.mxu0 0.0
    %2813 = vmatprep.subr.mxu0 0.0
    %2814 = vmatpush1.msra.mxu0 0.0
    %2815 = vmatprep.subr.mxu0 0.0
    %2816 = vmatpush1.msra.mxu0 0.0
    %2817 = vmatprep.subr.mxu0 0.0
    %2818 = vmatpush1.msra.mxu0 0.0
    %2819 = vmatprep.subr.mxu0 0.0
    %2820 = vmatpush1.msra.mxu0 0.0
    %2821 = vmatprep.subr.mxu0 0.0
    %2822 = vmatpush1.msra.mxu0 0.0
    %2823 = vmatprep.subr.mxu0 0.0
    %2824 = vmatpush1.msra.mxu0 0.0
    %2825 = vmatprep.subr.mxu0 0.0
    %2826 = vmatpush1.msra.mxu0 0.0
    %2827 = vmatprep.subr.mxu0 0.0
    %2828 = vmatpush1.msra.mxu0 0.0
    %2829 = vmatprep.subr.mxu0 0.0
    %2830 = vmatpush1.msra.mxu0 0.0
    %2831 = vmatprep.subr.mxu0 0.0
    %2832 = vmatpush1.msra.mxu0 0.0
    %2833 = vmatprep.subr.mxu0 0.0
    %2834 = vmatpush1.msra.mxu0 0.0
    %2835 = vmatprep.subr.mxu0 0.0
    %2836 = vmatpush1.msra.mxu0 0.0
    %2837 = vmatprep.subr.mxu0 0.0
    %2838 = vmatpush1.msra.mxu0 0.0
    %2839 = vmatprep.subr.mxu0 0.0
    %2840 = vmatpush1.msra.mxu0 0.0
    %2841 = vmatprep.subr.mxu0 0.0
    %2842 = vmatpush1.msra.mxu0 0.0
    %2843 = vmatprep.subr.mxu0 0.0
    %2844 = vmatpush1.msra.mxu0 0.0
    %2845 = vmatprep.subr.mxu0 0.0
    %2846 = vmatpush1.msra.mxu0 0.0
    %2847 = vmatprep.subr.mxu0 0.0
    %2848 = vmatpush1.msra.mxu0 0.0
    %2849 = vmatprep.subr.mxu0 0.0
    %2850 = vmatpush1.msra.mxu0 0.0
    %2851 = vmatprep.subr.mxu0 0.0
    %2852 = vmatpush1.msra.mxu0 0.0
    %2853 = vmatprep.subr.mxu0 0.0
    %2854 = vmatpush1.msra.mxu0 0.0
    %2855 = vmatprep.subr.mxu0 0.0
    %2856 = vmatpush1.msra.mxu0 0.0
    %2857 = vmatprep.subr.mxu0 0.0
    %2858 = vmatpush1.msra.mxu0 0.0
    %2859 = vmatprep.subr.mxu0 0.0
    %2860 = vmatpush1.msra.mxu0 0.0
    %2861 = vmatprep.subr.mxu0 0.0
    %2862 = vmatpush1.msra.mxu0 0.0
    %2863 = vmatprep.subr.mxu0 0.0
    %2864 = vmatpush1.msra.mxu0 0.0
    %2865 = vmatprep.mubr.f32.mxu0 0.0
    %2866 = vmatmul.mubr.f32.gmra.mrb[0].mxu0 %v2796
    %v2867 = vpop.f32.mrb[0].mxu0
    %v2868 = vadd.f32 0.0, %v2867
    %v2869 = vpop.f32.mrb[0].mxu0
    %2870 = vmatprep.mubr.f32.mxu0 0.0
    %2871 = vmatmul.mubr.f32.gmra.mrb[0].mxu0 %v2799
    %v2872 = vpop.f32.mrb[0].mxu0
    %v2873 = vadd.f32 0.0, %v2872
    %v2874 = vpop.f32.mrb[0].mxu0
    %2875 = vdwg.mxu0
    %v2876 = vsel %vm27, %v2868, 0.0
    %2877 = vadd.xlane.f32.xlu0 %v2876
    %v2878 = vpop.xlane.xlu0 %2877
    %v2879 = vsel %vm27, %v2873, 0.0
    %2880 = vadd.xlane.f32.xlu0 %v2879
    %v2881 = vpop.xlane.xlu0 %2880
    %v2882 = vmul.f32 %v2868, %v2868
    %v2883 = vmul.f32 %v2873, %v2873
    %v2884 = vsel %vm27, %v2882, 0.0
    %2885 = vadd.xlane.f32.xlu0 %v2884
    %v2886 = vpop.xlane.xlu0 %2885
    %v2887 = vsel %vm27, %v2883, 0.0
    %2888 = vadd.xlane.f32.xlu0 %v2887
    %v2889 = vpop.xlane.xlu0 %2888
    %v2890 = vmul.f32 %v2878, 0.03125
    %v2891 = vmul.f32 %v2881, 0.03125
    %v2892 = vmul.f32 %v2886, 0.03125
    %v2893 = vmul.f32 %v2889, 0.03125
    %v2894 = vmul.f32 %v2890, %v2890
    %v2895 = vmul.f32 %v2891, %v2891
    %v2896 = vsub.f32 %v2892, %v2894
    %v2897 = vsub.f32 %v2893, %v2895
    %v2898 = vsub.f32 %v2868, %v2890
    %v2899 = vsub.f32 %v2873, %v2891
    %v2900 = vadd.f32 %v2896, 1e-05
    %v2901 = vadd.f32 %v2897, 1e-05
    %v2902 = vrsqrt.pop %v2900
    %v2903 = vrsqrt.pop %v2901
    %v2904 = vmul.f32 %v2898, %v2902
    %v2905 = vmul.f32 %v2899, %v2903
    %v2906 = vmul.f32 %v2904, %v2673
    %v2907 = vmul.f32 %v2905, %v2673
    %v2908 = vadd.f32 %v2906, %v2679
    %v2909 = vadd.f32 %v2907, %v2679
    %v2910 = vadd.f32 %v2908, %v2680
    %v2911 = vadd.f32 %v2909, %v2681
    %2912 = vst.msk [vmem:[#allocation2] sm:$0xff] %vm27, %v2910
    %2913 = vst.msk [vmem:[#allocation2 + $0x8] sm:$0xff] %vm27, %v2911
    // Predicated region
    $region26: #{tpu_custom_call.1} parent=1 // pred_check
      _
    $region27: #{tpu_custom_call.1} parent=1 // pred_check_branch
      %2915 = sbr.rel (0) target = $region29
    $region28: #{tpu_custom_call.1} parent=1 // pred_region
      %s2917 = ssub.s32 256, 256
      %2918 = vsyncadd [#allocation3], %s2917
      %s2919 = sshll.u32 [#allocation2], 4
      %s2920 = int_to_ptr.vmem [resolvable:$true] %s2919
      %2925 = dma.vmem_to_hbm [thread:$0]  %s2920, 256, %s6, [#allocation3], 128, 128, 8
    $region29: #{tpu_custom_call.1} parent=1 // pred_fallthru
      _
    // Predicated region
    $region30: #{tpu_custom_call.1} parent=1 // pred_check
      _
    $region31: #{tpu_custom_call.1} parent=1 // pred_check_branch
      %2927 = sbr.rel (0) target = $region33
    $region32: #{tpu_custom_call.1} parent=1 // pred_region
      %2928 = dma.done [#allocation3], 256
    $region33: #{tpu_custom_call.1} parent=1 // pred_fallthru
      _
    %2929 = vsyncpa [#allocation3], 1

</llo_original>
